<compile_context>
chip_gen: v6e
topology: v6e:2x2x1
jax: 0.10.0
libtpu: 0.0.40
codegen_flags: <defaults>
</compile_context>

<pallas_src>
import functools

import jax
import jax.numpy as jnp
from jax.experimental import pallas as pl
from jax.experimental.pallas import tpu as pltpu


# ----------------------------------------------------------------------------
# synthetic model / signal constants (injected submodules in the PyTorch code)
# ----------------------------------------------------------------------------
HOP = 4            # generator upsampling factor (mel frame -> waveform samples)
N_MELS = 8
HIDDEN = 16
G_HEADS = 8        # generator output rows: 0..3 upsample phases, 4 = f0, 5..7 pad

D_CH = 8           # discriminator channels

MEL_WIN = 8        # synthetic mel transform frame size
MEL_HOP = 4
MEL_BINS = 8

MULTI_MEL_W = 45.0
FEAT_MATCH_W = 2.0
TPR_W = 1.0
TPR_TAU = 0.04

_LEAKY = 0.1


def _leaky(x):
    return jnp.where(x > 0.0, x, _LEAKY * x)


def _shift_r(x):
    """y[:, i] = x[:, i-1], zero fill at i=0 (value-level, no scratch)."""
    return jnp.concatenate([jnp.zeros_like(x[:, :1]), x[:, :-1]], axis=1)


def _shift_l(x):
    """y[:, i] = x[:, i+1], zero fill at i=T-1."""
    return jnp.concatenate([x[:, 1:], jnp.zeros_like(x[:, :1])], axis=1)


# ----------------------------------------------------------------------------
# Kernel 1: fused generator (conv -> leaky -> [tanh upsample heads ; f0 head])
#           both convs are single tap-folded MXU contractions.
# ----------------------------------------------------------------------------
def _generator_kernel(mel_ref, w1_ref, b1_ref, wo_ref, bo_ref, out_ref):
    x = mel_ref[0]                                            # [N_MELS, T] f32

    # conv1 (K=3, pad=1): tap-folded -> ONE contraction of depth 3*N_MELS
    rhs1 = jnp.concatenate([_shift_r(x), x, _shift_l(x)],
                           axis=0).astype(jnp.bfloat16)       # [3*N_MELS, T]
    h = jnp.dot(w1_ref[...], rhs1, preferred_element_type=jnp.float32)
    h = _leaky(h + b1_ref[...])                               # [HIDDEN, T] f32

    # conv2 heads (K=3, pad=1): depth 3*HIDDEN; rows 0..3 tanh phases, row 4 f0
    rhs2 = jnp.concatenate([_shift_r(h), h, _shift_l(h)],
                           axis=0).astype(jnp.bfloat16)       # [3*HIDDEN, T]
    o = jnp.dot(wo_ref[...], rhs2, preferred_element_type=jnp.float32)
    o = o + bo_ref[...]
    rows = jax.lax.broadcasted_iota(jnp.int32, o.shape, 0)
    out_ref[0] = jnp.where(rows < HOP, jnp.tanh(o), o)        # one dense (8,T) store


def generator_forward(mel, params):
    """mel [B, N_MELS, T] -> gen_out [B, G_HEADS, T]: rows 0..3 = waveform hop
    phases (tanh), row 4 = f0, rows 5..7 = zero padding."""
    b, _, t = mel.shape
    return pl.pallas_call(
        _generator_kernel,
        out_shape=jax.ShapeDtypeStruct((b, G_HEADS, t), jnp.float32),
        grid_spec=pltpu.PrefetchScalarGridSpec(
            num_scalar_prefetch=0,
            grid=(b,),
            in_specs=[
                pl.BlockSpec((1, N_MELS, t), lambda i: (i, 0, 0)),
                pl.BlockSpec((HIDDEN, 3 * N_MELS), lambda i: (0, 0)),
                pl.BlockSpec((HIDDEN, 1), lambda i: (0, 0)),
                pl.BlockSpec((G_HEADS, 3 * HIDDEN), lambda i: (0, 0)),
                pl.BlockSpec((G_HEADS, 1), lambda i: (0, 0)),
            ],
            out_specs=pl.BlockSpec((1, G_HEADS, t), lambda i: (i, 0, 0)),
        ),
        compiler_params=pltpu.CompilerParams(
            dimension_semantics=("parallel",)),
    )(mel, params["g_w1s"], params["g_b1c"], params["g_wos"], params["g_boc"])


# ----------------------------------------------------------------------------
# Kernel 2: fused 3-conv discriminator over real AND generated speech of one
#           item + fused feature-matching partial reductions.  Stride-2 convs
#           are realized as hop-phase decompositions; feature maps never reach
#           HBM - only one dense (8, T) block per item is written.
# ----------------------------------------------------------------------------
def _disc_fm_kernel(real_ref, gen_ref, w1_ref, b1_ref, w2_ref, b2_ref,
                    w3_ref, b3_ref, out_ref):
    t = real_ref.shape[-1]

    def trunk(xq):                                            # xq [HOP, T] f32
        # conv1: Cin=1, Cout=8, K=5, stride=2, pad=2.  VPU broadcast-MACs with
        # the shifted phase rows hoisted once and reused by both output phases.
        rows = [_shift_r(xq[2:3]), _shift_r(xq[3:4]),
                xq[0:1], xq[1:2], xq[2:3], xq[3:4], _shift_l(xq[0:1])]
        acc0 = jnp.zeros((D_CH, t), jnp.float32)
        acc1 = jnp.zeros((D_CH, t), jnp.float32)
        for k in range(5):
            wk = w1_ref[:, k:k + 1]
            acc0 = acc0 + wk * rows[k]
            acc1 = acc1 + wk * rows[k + 2]
        f1 = jnp.concatenate([_leaky(acc0 + b1_ref[...]),
                              _leaky(acc1 + b1_ref[...])], axis=0)      # [16, T]

        # conv2: K=5, stride=2, pad=2 -> ONE matmul, contraction 5*D_CH
        rhs2 = jnp.concatenate([_shift_r(f1), f1, _shift_l(f1[:D_CH])],
                               axis=0).astype(jnp.bfloat16)             # [40, T]
        f2 = _leaky(jnp.dot(w2_ref[...], rhs2,
                            preferred_element_type=jnp.float32) + b2_ref[...])

        # conv3: Cout=1 (zero-padded to 8 rows), K=3, stride=1 -> ONE matmul
        rhs3 = jnp.concatenate([_shift_r(f2), f2, _shift_l(f2)],
                               axis=0).astype(jnp.bfloat16)             # [24, T]
        s = jnp.dot(w3_ref[...], rhs3, preferred_element_type=jnp.float32)
        return f1, f2, s[0:1, :] + b3_ref[...]

    f1r, f2r, sr = trunk(real_ref[0])                          # real waveform
    f1g, f2g, sg = trunk(gen_ref[0][:HOP, :])                  # generated (phase rows)

    # feature-matching partial reductions fused here (phase-permuted order;
    # the mean is permutation invariant) so the fmaps never hit HBM.
    fm1 = jnp.sum(jnp.abs(f1r - f1g), axis=0, keepdims=True)   # [1, T]
    fm2 = jnp.sum(jnp.abs(f2r - f2g), axis=0, keepdims=True)   # [1, T]

    out_ref[0] = jnp.concatenate(
        [sr, sg, fm1, fm2, jnp.zeros((4, t), jnp.float32)], axis=0)  # dense (8,T)


def discriminator_forward(real_ph, gen_out, params):
    """real_ph [B, HOP, T] (phase layout), gen_out [B, G_HEADS, T]
    -> dsc [B, 8, T]: row 0 = score(real), row 1 = score(generated),
    row 2 = per-step sum_c |f1_r - f1_g|, row 3 = per-step sum_c |f2_r - f2_g|."""
    b, _, t = real_ph.shape
    return pl.pallas_call(
        _disc_fm_kernel,
        out_shape=jax.ShapeDtypeStruct((b, 8, t), jnp.float32),
        grid_spec=pltpu.PrefetchScalarGridSpec(
            num_scalar_prefetch=0,
            grid=(b,),
            in_specs=[
                pl.BlockSpec((1, HOP, t), lambda i: (i, 0, 0)),
                pl.BlockSpec((1, G_HEADS, t), lambda i: (i, 0, 0)),
                pl.BlockSpec((D_CH, 5), lambda i: (0, 0)),
                pl.BlockSpec((D_CH, 1), lambda i: (0, 0)),
                pl.BlockSpec((D_CH, 5 * D_CH), lambda i: (0, 0)),
                pl.BlockSpec((D_CH, 1), lambda i: (0, 0)),
                pl.BlockSpec((D_CH, 3 * D_CH), lambda i: (0, 0)),
                pl.BlockSpec((1, 1), lambda i: (0, 0)),
            ],
            out_specs=pl.BlockSpec((1, 8, t), lambda i: (i, 0, 0)),
        ),
        compiler_params=pltpu.CompilerParams(
            dimension_semantics=("parallel",)),
    )(real_ph, gen_out, params["d_w1m"], params["d_b1c"], params["d_w2s"],
      params["d_b2c"], params["d_w3s"], params["d_b3c"])


# ----------------------------------------------------------------------------
# Kernel 3: all scalar losses of one turn, fused in a single launch.
# ----------------------------------------------------------------------------
def _tpr_from_scores(dr, dg, m_med, tau):
    diff = dr - dg
    mask = diff < m_med
    cnt = jnp.sum(mask.astype(jnp.float32))
    sq = jnp.where(mask, (diff - m_med) ** 2, 0.0)
    # guard the empty-mask case (torch.mean of an empty tensor is NaN)
    l_rel = jnp.where(cnt > 0.0, jnp.sum(sq) / jnp.maximum(cnt, 1.0), 0.0)
    return tau - jnp.maximum(tau - l_rel, 0.0)                 # == min(l_rel, tau)


def _frames(ph, n):
    # mel frame matrix [MEL_WIN, n] from a hop-phase waveform [HOP, T]:
    # window sample w of frame j is phase (w % HOP) at time (j + w // HOP).
    return jnp.concatenate([ph[:, :n], ph[:, 1:n + 1]], axis=0)


def _gen_losses_kernel(dsc_ref, real_ref, gen_ref, pitch_ref, basis_ref, med_ref,
                       o_ref, *, batch, t, n_frames, tau, fm_w, mel_w, tpr_w):
    dsc = dsc_ref[...]                                         # [B, 8, T]
    dr = dsc[:, 0:1, :]
    dg = dsc[:, 1:2, :]
    loss_gen = jnp.mean((1.0 - dg) ** 2)

    # feature matching: per-time |delta| sums came from the discriminator
    # kernel (rows 2/3); only the tiny scalar reduction remains here.
    # NOTE: the 2.0 below is feature_loss()'s own factor; fm_w is applied on top.
    fm1 = jnp.sum(dsc[:, 2:3, :]) / float(batch * 2 * D_CH * t)
    fm2 = jnp.sum(dsc[:, 3:4, :]) / float(batch * D_CH * t)
    loss_fm = 2.0 * (fm1 + fm2)

    # synthetic log-mel L1: ONE basis matmul per (real / generated) frame stack
    real = real_ref[...]                                       # [B, HOP, T]
    gen = gen_ref[...]                                         # [B, 8, T]
    fr_r = jnp.concatenate([_frames(real[b], n_frames) for b in range(batch)],
                           axis=1)                             # [MEL_WIN, B*n]
    fr_g = jnp.concatenate([_frames(gen[b, :HOP, :], n_frames)
                            for b in range(batch)], axis=1)
    mel_r = jnp.dot(basis_ref[...], fr_r, preferred_element_type=jnp.float32)
    mel_g = jnp.dot(basis_ref[...], fr_g, preferred_element_type=jnp.float32)
    logdiff = jnp.abs(jnp.log(jnp.abs(mel_g) + 1e-5)
                      - jnp.log(jnp.abs(mel_r) + 1e-5))
    loss_mel = jnp.sum(logdiff) / float(batch * MEL_BINS * n_frames)

    loss_tpr = _tpr_from_scores(dr, dg, med_ref[0], tau)
    loss_f0 = jnp.mean(jnp.abs(gen[:, HOP:HOP + 1, :] - pitch_ref[...]))

    total = (loss_gen + fm_w * loss_fm + mel_w * loss_mel
             + tpr_w * loss_tpr + loss_f0)
    zero = jnp.zeros((), jnp.float32)
    o_ref[0, 0] = total
    o_ref[0, 1] = loss_gen
    o_ref[0, 2] = loss_fm
    o_ref[0, 3] = loss_mel
    o_ref[0, 4] = loss_tpr
    o_ref[0, 5] = loss_f0
    o_ref[0, 6] = zero          # loss_mel_recon (no BigVGAN branch here)
    o_ref[0, 7] = zero          # loss_kl (no VitsDecoder branch here)


def _disc_losses_kernel(dsc_ref, med_ref, o_ref, *, tau, tpr_w):
    dsc = dsc_ref[...]
    dr = dsc[:, 0:1, :]
    dg = dsc[:, 1:2, :]
    loss_disc = jnp.mean((1.0 - dr) ** 2) + jnp.mean(dg ** 2)
    loss_tpr = _tpr_from_scores(dr, dg, med_ref[0], tau)
    o_ref[0, 0] = loss_disc + tpr_w * loss_tpr
    o_ref[0, 1] = loss_disc
    o_ref[0, 2] = loss_tpr
    o_ref[0, 3] = jnp.zeros((), jnp.float32)


def _gen_losses_call(dsc, real_ph, gen_out, pitch, basis_t, median, batch, t):
    n_frames = (HOP * t - MEL_WIN) // MEL_HOP + 1
    kernel = functools.partial(_gen_losses_kernel, batch=batch, t=t,
                               n_frames=n_frames, tau=TPR_TAU, fm_w=FEAT_MATCH_W,
                               mel_w=MULTI_MEL_W, tpr_w=TPR_W)
    vmem = pl.BlockSpec(memory_space=pltpu.MemorySpace.VMEM)
    smem = pl.BlockSpec(memory_space=pltpu.MemorySpace.SMEM)
    # TODO(synk): for production-length audio, tile this call over time with a
    # grid + pl.when-gated scalar accumulation instead of full-array VMEM blocks.
    out = pl.pallas_call(
        kernel,
        out_shape=jax.ShapeDtypeStruct((1, 8), jnp.float32),
        in_specs=[vmem, vmem, vmem, vmem, vmem, smem],
        out_specs=smem,
        compiler_params=pltpu.CompilerParams(vmem_limit_bytes=32 * 1024 * 1024),
    )(dsc, real_ph, gen_out, pitch, basis_t, median)
    return out[0]


def _disc_losses_call(dsc, median):
    kernel = functools.partial(_disc_losses_kernel, tau=TPR_TAU, tpr_w=TPR_W)
    out = pl.pallas_call(
        kernel,
        out_shape=jax.ShapeDtypeStruct((1, 4), jnp.float32),
        in_specs=[pl.BlockSpec(memory_space=pltpu.MemorySpace.VMEM),
                  pl.BlockSpec(memory_space=pltpu.MemorySpace.SMEM)],
        out_specs=pl.BlockSpec(memory_space=pltpu.MemorySpace.SMEM),
        compiler_params=pltpu.CompilerParams(vmem_limit_bytes=32 * 1024 * 1024),
    )(dsc, median)
    return out[0]


# ----------------------------------------------------------------------------
# HiFiGan forward (generator / discriminator turns)
# ----------------------------------------------------------------------------
def _median_lower_middle(x):
    # TODO(synk): torch.median needs a sort, which has no clean Pallas
    # equivalent; the median scalar is computed once in plain JAX (lower-middle
    # element, matching torch semantics) and fed to the loss kernel via SMEM.
    flat = x.reshape(-1)
    return jnp.sort(flat)[(flat.size - 1) // 2].reshape(1)


def _phase_split(speech, t):
    # real waveform -> hop-phase layout [B, HOP, T]; the generated waveform
    # already lives in this layout (generator output rows 0..3), so no flat
    # generated waveform is ever materialized in HBM.
    b = speech.shape[0]
    return speech.reshape(b, t, HOP).transpose(0, 2, 1)


def _forward_generator(params, speech, speech_feat, pitch_feat):
    b = speech.shape[0]
    t = speech_feat.shape[-1]
    gen_out = generator_forward(speech_feat, params)           # [B, 8, T]
    real_ph = _phase_split(speech, t)                          # [B, HOP, T]
    dsc = discriminator_forward(real_ph, gen_out, params)      # [B, 8, T]
    median = _median_lower_middle(dsc[:, 0, :] - dsc[:, 1, :])
    losses = _gen_losses_call(dsc, real_ph, gen_out,
                              pitch_feat.reshape(b, 1, t),
                              params["mel_basisT"], median, b, t)
    return {"loss": losses[0], "loss_gen": losses[1], "loss_fm": losses[2],
            "loss_mel": losses[3], "loss_tpr": losses[4], "loss_f0": losses[5],
            "loss_mel_recon": losses[6], "loss_kl": losses[7]}


def _forward_discriminator(params, speech, speech_feat):
    b = speech.shape[0]
    t = speech_feat.shape[-1]
    gen_out = jax.lax.stop_gradient(generator_forward(speech_feat, params))
    real_ph = _phase_split(speech, t)
    dsc = discriminator_forward(real_ph, gen_out, params)
    median = _median_lower_middle(dsc[:, 0, :] - dsc[:, 1, :])
    losses = _disc_losses_call(dsc, median)                    # TPR_W != 0 path
    return {"loss": losses[0], "loss_disc": losses[1], "loss_tpr": losses[2]}


_forward_generator_jit = jax.jit(_forward_generator)
_forward_discriminator_jit = jax.jit(_forward_discriminator)


def hifigan_forward(batch, params):
    # NOTE: batch['turn'] is a Python-level branch, exactly as in the PyTorch
    # module (not a traced value).
    if batch["turn"] == "generator":
        return _forward_generator_jit(params, batch["speech"],
                                      batch["speech_feat"], batch["pitch_feat"])
    return _forward_discriminator_jit(params, batch["speech"],
                                      batch["speech_feat"])


# ----------------------------------------------------------------------------
# parameters (PyTorch Conv1d layouts) + kernel-friendly preparation
# ----------------------------------------------------------------------------
def init_params(key):
    ks = jax.random.split(key, 8)
    s = 0.1
    return {
        # generator (Conv1d layout [C_out, C_in, K])
        "g_w1": s * jax.random.normal(ks[0], (HIDDEN, N_MELS, 3), jnp.float32),
        "g_b1": jnp.zeros((HIDDEN,), jnp.float32),
        "g_wu": s * jax.random.normal(ks[1], (HOP, HIDDEN, 3), jnp.float32),
        "g_bu": jnp.zeros((HOP,), jnp.float32),
        "g_wf0": s * jax.random.normal(ks[2], (1, HIDDEN, 3), jnp.float32),
        "g_bf0": jnp.zeros((1,), jnp.float32),
        # discriminator
        "d_w1": s * jax.random.normal(ks[3], (D_CH, 1, 5), jnp.float32),
        "d_b1": jnp.zeros((D_CH,), jnp.float32),
        "d_w2": s * jax.random.normal(ks[4], (D_CH, D_CH, 5), jnp.float32),
        "d_b2": jnp.zeros((D_CH,), jnp.float32),
        "d_w3": s * jax.random.normal(ks[5], (1, D_CH, 3), jnp.float32),
        "d_b3": jnp.zeros((1,), jnp.float32),
        # synthetic mel "filterbank" [win, mel_bins]
        "mel_basis": jnp.abs(s * jax.random.normal(ks[6], (MEL_WIN, MEL_BINS),
                                                   jnp.float32)),
    }


def prepare_kernel_params(p):
    """Kernel-friendly layouts: tap-folded (C_out, K*C_in) weights so every conv
    is ONE MXU contraction, bf16 MXU operands, f32 biases as [C, 1] columns,
    skinny output heads zero-padded to 8 rows."""
    g_wo = jnp.concatenate([p["g_wu"], p["g_wf0"]], axis=0)          # [5, HIDDEN, 3]
    g_wo = jnp.pad(g_wo, ((0, G_HEADS - HOP - 1), (0, 0), (0, 0)))   # [8, HIDDEN, 3]
    g_bo = jnp.pad(jnp.concatenate([p["g_bu"], p["g_bf0"]], axis=0),
                   (0, G_HEADS - HOP - 1))
    d_w3 = jnp.pad(p["d_w3"], ((0, D_CH - 1), (0, 0), (0, 0)))       # [8, D_CH, 3]
    return {
        "g_w1s": p["g_w1"].transpose(0, 2, 1).reshape(HIDDEN, 3 * N_MELS)
                 .astype(jnp.bfloat16),                               # [16, 24]
        "g_b1c": p["g_b1"].reshape(HIDDEN, 1),
        "g_wos": g_wo.transpose(0, 2, 1).reshape(G_HEADS, 3 * HIDDEN)
                 .astype(jnp.bfloat16),                               # [8, 48]
        "g_boc": g_bo.reshape(G_HEADS, 1),
        "d_w1m": p["d_w1"][:, 0, :],                                  # [8, 5] f32 (VPU path)
        "d_b1c": p["d_b1"].reshape(D_CH, 1),
        "d_w2s": p["d_w2"].transpose(0, 2, 1).reshape(D_CH, 5 * D_CH)
                 .astype(jnp.bfloat16),                               # [8, 40]
        "d_b2c": p["d_b2"].reshape(D_CH, 1),
        "d_w3s": d_w3.transpose(0, 2, 1).reshape(D_CH, 3 * D_CH)
                 .astype(jnp.bfloat16),                               # [8, 24]
        "d_b3c": p["d_b3"].reshape(1, 1),
        "mel_basisT": p["mel_basis"].T,                               # [MEL_BINS, MEL_WIN]
    }


# ----------------------------------------------------------------------------
if __name__ == "__main__":
    key = jax.random.PRNGKey(0)
    k_p, k_speech, k_mel, k_pitch = jax.random.split(key, 4)

    B, T = 2, 16
    L = T * HOP  # 64

    params = prepare_kernel_params(init_params(k_p))
    batch = {
        "turn": "generator",
        "speech": jax.random.normal(k_speech, (B, L), jnp.float32),
        "speech_feat": jax.random.normal(k_mel, (B, N_MELS, T), jnp.float32),
        "pitch_feat": jax.random.normal(k_pitch, (B, T), jnp.float32),
    }

    out_gen = hifigan_forward(batch, params)
    jax.block_until_ready(out_gen["loss"])

    out_disc = hifigan_forward(dict(batch, turn="discriminator"), params)
    jax.block_until_ready(out_disc["loss"])

    print("KERNEL_OK")
</pallas_src>

<mosaic_0001>
module attributes {stable_mosaic.version = 11 : i64} {
  func.func @_generator_kernel(%arg0: i32, %arg1: memref<1x8x16xf32, #tpu.memory_space<vmem>>, %arg2: memref<16x24xbf16, #tpu.memory_space<vmem>>, %arg3: memref<16x1xf32, #tpu.memory_space<vmem>>, %arg4: memref<8x48xbf16, #tpu.memory_space<vmem>>, %arg5: memref<8x1xf32, #tpu.memory_space<vmem>>, %arg6: memref<1x8x16xf32, #tpu.memory_space<vmem>>) attributes {dimension_semantics = [#tpu.dimension_semantics<parallel>], iteration_bounds = array<i64: 2>, scalar_prefetch = 0 : i64, scratch_operands = 0 : i64, tpu.core_type = #tpu.core_type<tc>, window_params = [{transform_indices = @transform_0, window_bounds = array<i64: 1, 8, 16>}, {pipeline_mode = #tpu.pipeline_mode<synchronous>, transform_indices = @transform_1, window_bounds = array<i64: 16, 24>}, {pipeline_mode = #tpu.pipeline_mode<synchronous>, transform_indices = @transform_2, window_bounds = array<i64: 16, 1>}, {pipeline_mode = #tpu.pipeline_mode<synchronous>, transform_indices = @transform_3, window_bounds = array<i64: 8, 48>}, {pipeline_mode = #tpu.pipeline_mode<synchronous>, transform_indices = @transform_4, window_bounds = array<i64: 8, 1>}, {transform_indices = @transform_5, window_bounds = array<i64: 1, 8, 16>}]} {
    %c0 = arith.constant 0 : index
    %c0_0 = arith.constant 0 : index
    %c0_1 = arith.constant 0 : index
    %0 = vector.load %arg1[%c0, %c0_0, %c0_1] : memref<1x8x16xf32, #tpu.memory_space<vmem>>, vector<1x8x16xf32>
    %1 = vector.shape_cast %0 : vector<1x8x16xf32> to vector<8x16xf32>
    %cst = arith.constant 0.000000e+00 : f32
    %2 = vector.broadcast %cst : f32 to vector<8x1xf32>
    %3 = vector.extract_strided_slice %1 {offsets = [0, 0], sizes = [8, 15], strides = [1, 1]} : vector<8x16xf32> to vector<8x15xf32>
    %4 = tpu.concatenate %2, %3 in 1 : vector<8x1xf32>, vector<8x15xf32> -> vector<8x16xf32>
    %5 = vector.extract_strided_slice %1 {offsets = [0, 1], sizes = [8, 15], strides = [1, 1]} : vector<8x16xf32> to vector<8x15xf32>
    %cst_2 = arith.constant 0.000000e+00 : f32
    %6 = vector.broadcast %cst_2 : f32 to vector<8x1xf32>
    %7 = tpu.concatenate %5, %6 in 1 : vector<8x15xf32>, vector<8x1xf32> -> vector<8x16xf32>
    %8 = tpu.concatenate %4, %1, %7 in 0 : vector<8x16xf32>, vector<8x16xf32>, vector<8x16xf32> -> vector<24x16xf32>
    %9 = arith.truncf %8 : vector<24x16xf32> to vector<24x16xbf16>
    %c0_3 = arith.constant 0 : index
    %c0_4 = arith.constant 0 : index
    %10 = vector.load %arg2[%c0_3, %c0_4] : memref<16x24xbf16, #tpu.memory_space<vmem>>, vector<16x24xbf16>
    %cst_5 = arith.constant dense<0.000000e+00> : vector<16x16xf32>
    %11 = tpu.matmul %10, %9, %cst_5 {dimension_numbers = #tpu.dot_dimension_numbers<[1], [0], [0], [1], [0, 0, 1, 1], [], []>} : vector<16x24xbf16>, vector<24x16xbf16>, vector<16x16xf32> -> vector<16x16xf32>
    %c0_6 = arith.constant 0 : index
    %c0_7 = arith.constant 0 : index
    %12 = vector.load %arg3[%c0_6, %c0_7] : memref<16x1xf32, #tpu.memory_space<vmem>>, vector<16x1xf32>
    %13 = vector.broadcast %12 : vector<16x1xf32> to vector<16x16xf32>
    %14 = arith.addf %11, %13 : vector<16x16xf32>
    %cst_8 = arith.constant 0.000000e+00 : f32
    %15 = vector.broadcast %cst_8 : f32 to vector<16x16xf32>
    %16 = arith.cmpf ogt, %14, %15 : vector<16x16xf32>
    %cst_9 = arith.constant 1.000000e-01 : f32
    %17 = vector.broadcast %cst_9 : f32 to vector<16x16xf32>
    %18 = arith.mulf %17, %14 : vector<16x16xf32>
    %19 = arith.select %16, %14, %18 : vector<16x16xi1>, vector<16x16xf32>
    %cst_10 = arith.constant 0.000000e+00 : f32
    %20 = vector.broadcast %cst_10 : f32 to vector<16x1xf32>
    %21 = vector.extract_strided_slice %19 {offsets = [0, 0], sizes = [16, 15], strides = [1, 1]} : vector<16x16xf32> to vector<16x15xf32>
    %22 = tpu.concatenate %20, %21 in 1 : vector<16x1xf32>, vector<16x15xf32> -> vector<16x16xf32>
    %23 = vector.extract_strided_slice %19 {offsets = [0, 1], sizes = [16, 15], strides = [1, 1]} : vector<16x16xf32> to vector<16x15xf32>
    %cst_11 = arith.constant 0.000000e+00 : f32
    %24 = vector.broadcast %cst_11 : f32 to vector<16x1xf32>
    %25 = tpu.concatenate %23, %24 in 1 : vector<16x15xf32>, vector<16x1xf32> -> vector<16x16xf32>
    %26 = tpu.concatenate %22, %19, %25 in 0 : vector<16x16xf32>, vector<16x16xf32>, vector<16x16xf32> -> vector<48x16xf32>
    %27 = arith.truncf %26 : vector<48x16xf32> to vector<48x16xbf16>
    %c0_12 = arith.constant 0 : index
    %c0_13 = arith.constant 0 : index
    %28 = vector.load %arg4[%c0_12, %c0_13] : memref<8x48xbf16, #tpu.memory_space<vmem>>, vector<8x48xbf16>
    %cst_14 = arith.constant dense<0.000000e+00> : vector<8x16xf32>
    %29 = tpu.matmul %28, %27, %cst_14 {dimension_numbers = #tpu.dot_dimension_numbers<[1], [0], [0], [1], [0, 0, 1, 1], [], []>} : vector<8x48xbf16>, vector<48x16xbf16>, vector<8x16xf32> -> vector<8x16xf32>
    %c0_15 = arith.constant 0 : index
    %c0_16 = arith.constant 0 : index
    %30 = vector.load %arg5[%c0_15, %c0_16] : memref<8x1xf32, #tpu.memory_space<vmem>>, vector<8x1xf32>
    %31 = vector.broadcast %30 : vector<8x1xf32> to vector<8x16xf32>
    %32 = arith.addf %29, %31 : vector<8x16xf32>
    %33 = tpu.iota {dimensions = array<i32: 0>} : vector<8x16xi32>
    %c4_i32 = arith.constant 4 : i32
    %34 = vector.broadcast %c4_i32 : i32 to vector<8x16xi32>
    %35 = arith.cmpi slt, %33, %34 : vector<8x16xi32>
    %36 = math.tanh %32 : vector<8x16xf32>
    %37 = arith.select %35, %36, %32 : vector<8x16xi1>, vector<8x16xf32>
    %c0_17 = arith.constant 0 : index
    %c0_18 = arith.constant 0 : index
    %c0_19 = arith.constant 0 : index
    %38 = vector.load %arg6[%c0_17, %c0_18, %c0_19] : memref<1x8x16xf32, #tpu.memory_space<vmem>>, vector<1x8x16xf32>
    %39 = vector.shape_cast %38 : vector<1x8x16xf32> to vector<8x16xf32>
    %40 = vector.shape_cast %37 : vector<8x16xf32> to vector<1x8x16xf32>
    tpu.vector_store %arg6[%c0_17, %c0_18, %c0_19], %40 {strides = array<i32>} : memref<1x8x16xf32, #tpu.memory_space<vmem>>, vector<1x8x16xf32>,
    return
  }
  func.func @transform_0(%arg0: i32) -> (i32, i32, i32) {
    %c0_i32 = arith.constant 0 : i32
    %c0_i32_0 = arith.constant 0 : i32
    %c0_i32_1 = arith.constant 0 : i32
    return %arg0, %c0_i32, %c0_i32_0 : i32, i32, i32
  }
  func.func @transform_1(%arg0: i32) -> (i32, i32) {
    %c0_i32 = arith.constant 0 : i32
    %c0_i32_0 = arith.constant 0 : i32
    %c0_i32_1 = arith.constant 0 : i32
    return %c0_i32, %c0_i32_0 : i32, i32
  }
  func.func @transform_2(%arg0: i32) -> (i32, i32) {
    %c0_i32 = arith.constant 0 : i32
    %c0_i32_0 = arith.constant 0 : i32
    %c0_i32_1 = arith.constant 0 : i32
    return %c0_i32, %c0_i32_0 : i32, i32
  }
  func.func @transform_3(%arg0: i32) -> (i32, i32) {
    %c0_i32 = arith.constant 0 : i32
    %c0_i32_0 = arith.constant 0 : i32
    %c0_i32_1 = arith.constant 0 : i32
    return %c0_i32, %c0_i32_0 : i32, i32
  }
  func.func @transform_4(%arg0: i32) -> (i32, i32) {
    %c0_i32 = arith.constant 0 : i32
    %c0_i32_0 = arith.constant 0 : i32
    %c0_i32_1 = arith.constant 0 : i32
    return %c0_i32, %c0_i32_0 : i32, i32
  }
  func.func @transform_5(%arg0: i32) -> (i32, i32, i32) {
    %c0_i32 = arith.constant 0 : i32
    %c0_i32_0 = arith.constant 0 : i32
    %c0_i32_1 = arith.constant 0 : i32
    return %arg0, %c0_i32, %c0_i32_0 : i32, i32, i32
  }
}

module attributes {stable_mosaic.version = 11 : i64} {
  func.func @_disc_fm_kernel(%arg0: i32, %arg1: memref<1x4x16xf32, #tpu.memory_space<vmem>>, %arg2: memref<1x8x16xf32, #tpu.memory_space<vmem>>, %arg3: memref<8x5xf32, #tpu.memory_space<vmem>>, %arg4: memref<8x1xf32, #tpu.memory_space<vmem>>, %arg5: memref<8x40xbf16, #tpu.memory_space<vmem>>, %arg6: memref<8x1xf32, #tpu.memory_space<vmem>>, %arg7: memref<8x24xbf16, #tpu.memory_space<vmem>>, %arg8: memref<1x1xf32, #tpu.memory_space<vmem>>, %arg9: memref<1x8x16xf32, #tpu.memory_space<vmem>>) attributes {dimension_semantics = [#tpu.dimension_semantics<parallel>], iteration_bounds = array<i64: 2>, scalar_prefetch = 0 : i64, scratch_operands = 0 : i64, tpu.core_type = #tpu.core_type<tc>, window_params = [{transform_indices = @transform_0, window_bounds = array<i64: 1, 4, 16>}, {transform_indices = @transform_1, window_bounds = array<i64: 1, 8, 16>}, {pipeline_mode = #tpu.pipeline_mode<synchronous>, transform_indices = @transform_2, window_bounds = array<i64: 8, 5>}, {pipeline_mode = #tpu.pipeline_mode<synchronous>, transform_indices = @transform_3, window_bounds = array<i64: 8, 1>}, {pipeline_mode = #tpu.pipeline_mode<synchronous>, transform_indices = @transform_4, window_bounds = array<i64: 8, 40>}, {pipeline_mode = #tpu.pipeline_mode<synchronous>, transform_indices = @transform_5, window_bounds = array<i64: 8, 1>}, {pipeline_mode = #tpu.pipeline_mode<synchronous>, transform_indices = @transform_6, window_bounds = array<i64: 8, 24>}, {pipeline_mode = #tpu.pipeline_mode<synchronous>, transform_indices = @transform_7, window_bounds = array<i64: 1, 1>}, {transform_indices = @transform_8, window_bounds = array<i64: 1, 8, 16>}]} {
    %c0 = arith.constant 0 : index
    %c0_0 = arith.constant 0 : index
    %c0_1 = arith.constant 0 : index
    %0 = vector.load %arg1[%c0, %c0_0, %c0_1] : memref<1x4x16xf32, #tpu.memory_space<vmem>>, vector<1x4x16xf32>
    %1 = vector.shape_cast %0 : vector<1x4x16xf32> to vector<4x16xf32>
    %2 = vector.extract_strided_slice %1 {offsets = [2, 0], sizes = [1, 16], strides = [1, 1]} : vector<4x16xf32> to vector<1x16xf32>
    %cst = arith.constant 0.000000e+00 : f32
    %3 = vector.broadcast %cst : f32 to vector<1x1xf32>
    %4 = vector.extract_strided_slice %2 {offsets = [0, 0], sizes = [1, 15], strides = [1, 1]} : vector<1x16xf32> to vector<1x15xf32>
    %5 = tpu.concatenate %3, %4 in 1 : vector<1x1xf32>, vector<1x15xf32> -> vector<1x16xf32>
    %6 = vector.extract_strided_slice %1 {offsets = [3, 0], sizes = [1, 16], strides = [1, 1]} : vector<4x16xf32> to vector<1x16xf32>
    %cst_2 = arith.constant 0.000000e+00 : f32
    %7 = vector.broadcast %cst_2 : f32 to vector<1x1xf32>
    %8 = vector.extract_strided_slice %6 {offsets = [0, 0], sizes = [1, 15], strides = [1, 1]} : vector<1x16xf32> to vector<1x15xf32>
    %9 = tpu.concatenate %7, %8 in 1 : vector<1x1xf32>, vector<1x15xf32> -> vector<1x16xf32>
    %10 = vector.extract_strided_slice %1 {offsets = [0, 0], sizes = [1, 16], strides = [1, 1]} : vector<4x16xf32> to vector<1x16xf32>
    %11 = vector.extract_strided_slice %1 {offsets = [1, 0], sizes = [1, 16], strides = [1, 1]} : vector<4x16xf32> to vector<1x16xf32>
    %12 = vector.extract_strided_slice %1 {offsets = [2, 0], sizes = [1, 16], strides = [1, 1]} : vector<4x16xf32> to vector<1x16xf32>
    %13 = vector.extract_strided_slice %1 {offsets = [3, 0], sizes = [1, 16], strides = [1, 1]} : vector<4x16xf32> to vector<1x16xf32>
    %14 = vector.extract_strided_slice %1 {offsets = [0, 0], sizes = [1, 16], strides = [1, 1]} : vector<4x16xf32> to vector<1x16xf32>
    %15 = vector.extract_strided_slice %14 {offsets = [0, 1], sizes = [1, 15], strides = [1, 1]} : vector<1x16xf32> to vector<1x15xf32>
    %cst_3 = arith.constant 0.000000e+00 : f32
    %16 = vector.broadcast %cst_3 : f32 to vector<1x1xf32>
    %17 = tpu.concatenate %15, %16 in 1 : vector<1x15xf32>, vector<1x1xf32> -> vector<1x16xf32>
    %cst_4 = arith.constant 0.000000e+00 : f32
    %18 = vector.broadcast %cst_4 : f32 to vector<8x16xf32>
    %cst_5 = arith.constant 0.000000e+00 : f32
    %19 = vector.broadcast %cst_5 : f32 to vector<8x16xf32>
    %c0_6 = arith.constant 0 : index
    %c0_7 = arith.constant 0 : index
    %20 = vector.load %arg3[%c0_6, %c0_7] : memref<8x5xf32, #tpu.memory_space<vmem>>, vector<8x1xf32>
    %21 = vector.broadcast %20 : vector<8x1xf32> to vector<8x16xf32>
    %22 = vector.broadcast %5 : vector<1x16xf32> to vector<8x16xf32>
    %23 = arith.mulf %21, %22 : vector<8x16xf32>
    %24 = arith.addf %18, %23 : vector<8x16xf32>
    %25 = vector.broadcast %20 : vector<8x1xf32> to vector<8x16xf32>
    %26 = vector.broadcast %10 : vector<1x16xf32> to vector<8x16xf32>
    %27 = arith.mulf %25, %26 : vector<8x16xf32>
    %28 = arith.addf %19, %27 : vector<8x16xf32>
    %c0_8 = arith.constant 0 : index
    %c1 = arith.constant 1 : index
    %29 = vector.load %arg3[%c0_8, %c1] : memref<8x5xf32, #tpu.memory_space<vmem>>, vector<8x1xf32>
    %30 = vector.broadcast %29 : vector<8x1xf32> to vector<8x16xf32>
    %31 = vector.broadcast %9 : vector<1x16xf32> to vector<8x16xf32>
    %32 = arith.mulf %30, %31 : vector<8x16xf32>
    %33 = arith.addf %24, %32 : vector<8x16xf32>
    %34 = vector.broadcast %29 : vector<8x1xf32> to vector<8x16xf32>
    %35 = vector.broadcast %11 : vector<1x16xf32> to vector<8x16xf32>
    %36 = arith.mulf %34, %35 : vector<8x16xf32>
    %37 = arith.addf %28, %36 : vector<8x16xf32>
    %c0_9 = arith.constant 0 : index
    %c2 = arith.constant 2 : index
    %38 = vector.load %arg3[%c0_9, %c2] : memref<8x5xf32, #tpu.memory_space<vmem>>, vector<8x1xf32>
    %39 = vector.broadcast %38 : vector<8x1xf32> to vector<8x16xf32>
    %40 = vector.broadcast %10 : vector<1x16xf32> to vector<8x16xf32>
    %41 = arith.mulf %39, %40 : vector<8x16xf32>
    %42 = arith.addf %33, %41 : vector<8x16xf32>
    %43 = vector.broadcast %38 : vector<8x1xf32> to vector<8x16xf32>
    %44 = vector.broadcast %12 : vector<1x16xf32> to vector<8x16xf32>
    %45 = arith.mulf %43, %44 : vector<8x16xf32>
    %46 = arith.addf %37, %45 : vector<8x16xf32>
    %c0_10 = arith.constant 0 : index
    %c3 = arith.constant 3 : index
    %47 = vector.load %arg3[%c0_10, %c3] : memref<8x5xf32, #tpu.memory_space<vmem>>, vector<8x1xf32>
    %48 = vector.broadcast %47 : vector<8x1xf32> to vector<8x16xf32>
    %49 = vector.broadcast %11 : vector<1x16xf32> to vector<8x16xf32>
    %50 = arith.mulf %48, %49 : vector<8x16xf32>
    %51 = arith.addf %42, %50 : vector<8x16xf32>
    %52 = vector.broadcast %47 : vector<8x1xf32> to vector<8x16xf32>
    %53 = vector.broadcast %13 : vector<1x16xf32> to vector<8x16xf32>
    %54 = arith.mulf %52, %53 : vector<8x16xf32>
    %55 = arith.addf %46, %54 : vector<8x16xf32>
    %c0_11 = arith.constant 0 : index
    %c4 = arith.constant 4 : index
    %56 = vector.load %arg3[%c0_11, %c4] : memref<8x5xf32, #tpu.memory_space<vmem>>, vector<8x1xf32>
    %57 = vector.broadcast %56 : vector<8x1xf32> to vector<8x16xf32>
    %58 = vector.broadcast %12 : vector<1x16xf32> to vector<8x16xf32>
    %59 = arith.mulf %57, %58 : vector<8x16xf32>
    %60 = arith.addf %51, %59 : vector<8x16xf32>
    %61 = vector.broadcast %56 : vector<8x1xf32> to vector<8x16xf32>
    %62 = vector.broadcast %17 : vector<1x16xf32> to vector<8x16xf32>
    %63 = arith.mulf %61, %62 : vector<8x16xf32>
    %64 = arith.addf %55, %63 : vector<8x16xf32>
    %c0_12 = arith.constant 0 : index
    %c0_13 = arith.constant 0 : index
    %65 = vector.load %arg4[%c0_12, %c0_13] : memref<8x1xf32, #tpu.memory_space<vmem>>, vector<8x1xf32>
    %66 = vector.broadcast %65 : vector<8x1xf32> to vector<8x16xf32>
    %67 = arith.addf %60, %66 : vector<8x16xf32>
    %cst_14 = arith.constant 0.000000e+00 : f32
    %68 = vector.broadcast %cst_14 : f32 to vector<8x16xf32>
    %69 = arith.cmpf ogt, %67, %68 : vector<8x16xf32>
    %cst_15 = arith.constant 1.000000e-01 : f32
    %70 = vector.broadcast %cst_15 : f32 to vector<8x16xf32>
    %71 = arith.mulf %70, %67 : vector<8x16xf32>
    %72 = arith.select %69, %67, %71 : vector<8x16xi1>, vector<8x16xf32>
    %c0_16 = arith.constant 0 : index
    %c0_17 = arith.constant 0 : index
    %73 = vector.load %arg4[%c0_16, %c0_17] : memref<8x1xf32, #tpu.memory_space<vmem>>, vector<8x1xf32>
    %74 = vector.broadcast %73 : vector<8x1xf32> to vector<8x16xf32>
    %75 = arith.addf %64, %74 : vector<8x16xf32>
    %cst_18 = arith.constant 0.000000e+00 : f32
    %76 = vector.broadcast %cst_18 : f32 to vector<8x16xf32>
    %77 = arith.cmpf ogt, %75, %76 : vector<8x16xf32>
    %cst_19 = arith.constant 1.000000e-01 : f32
    %78 = vector.broadcast %cst_19 : f32 to vector<8x16xf32>
    %79 = arith.mulf %78, %75 : vector<8x16xf32>
    %80 = arith.select %77, %75, %79 : vector<8x16xi1>, vector<8x16xf32>
    %81 = tpu.concatenate %72, %80 in 0 : vector<8x16xf32>, vector<8x16xf32> -> vector<16x16xf32>
    %cst_20 = arith.constant 0.000000e+00 : f32
    %82 = vector.broadcast %cst_20 : f32 to vector<16x1xf32>
    %83 = vector.extract_strided_slice %81 {offsets = [0, 0], sizes = [16, 15], strides = [1, 1]} : vector<16x16xf32> to vector<16x15xf32>
    %84 = tpu.concatenate %82, %83 in 1 : vector<16x1xf32>, vector<16x15xf32> -> vector<16x16xf32>
    %85 = vector.extract_strided_slice %81 {offsets = [0, 0], sizes = [8, 16], strides = [1, 1]} : vector<16x16xf32> to vector<8x16xf32>
    %86 = vector.extract_strided_slice %85 {offsets = [0, 1], sizes = [8, 15], strides = [1, 1]} : vector<8x16xf32> to vector<8x15xf32>
    %cst_21 = arith.constant 0.000000e+00 : f32
    %87 = vector.broadcast %cst_21 : f32 to vector<8x1xf32>
    %88 = tpu.concatenate %86, %87 in 1 : vector<8x15xf32>, vector<8x1xf32> -> vector<8x16xf32>
    %89 = tpu.concatenate %84, %81, %88 in 0 : vector<16x16xf32>, vector<16x16xf32>, vector<8x16xf32> -> vector<40x16xf32>
    %90 = arith.truncf %89 : vector<40x16xf32> to vector<40x16xbf16>
    %c0_22 = arith.constant 0 : index
    %c0_23 = arith.constant 0 : index
    %91 = vector.load %arg5[%c0_22, %c0_23] : memref<8x40xbf16, #tpu.memory_space<vmem>>, vector<8x40xbf16>
    %cst_24 = arith.constant dense<0.000000e+00> : vector<8x16xf32>
    %92 = tpu.matmul %91, %90, %cst_24 {dimension_numbers = #tpu.dot_dimension_numbers<[1], [0], [0], [1], [0, 0, 1, 1], [], []>} : vector<8x40xbf16>, vector<40x16xbf16>, vector<8x16xf32> -> vector<8x16xf32>
    %c0_25 = arith.constant 0 : index
    %c0_26 = arith.constant 0 : index
    %93 = vector.load %arg6[%c0_25, %c0_26] : memref<8x1xf32, #tpu.memory_space<vmem>>, vector<8x1xf32>
    %94 = vector.broadcast %93 : vector<8x1xf32> to vector<8x16xf32>
    %95 = arith.addf %92, %94 : vector<8x16xf32>
    %cst_27 = arith.constant 0.000000e+00 : f32
    %96 = vector.broadcast %cst_27 : f32 to vector<8x16xf32>
    %97 = arith.cmpf ogt, %95, %96 : vector<8x16xf32>
    %cst_28 = arith.constant 1.000000e-01 : f32
    %98 = vector.broadcast %cst_28 : f32 to vector<8x16xf32>
    %99 = arith.mulf %98, %95 : vector<8x16xf32>
    %100 = arith.select %97, %95, %99 : vector<8x16xi1>, vector<8x16xf32>
    %cst_29 = arith.constant 0.000000e+00 : f32
    %101 = vector.broadcast %cst_29 : f32 to vector<8x1xf32>
    %102 = vector.extract_strided_slice %100 {offsets = [0, 0], sizes = [8, 15], strides = [1, 1]} : vector<8x16xf32> to vector<8x15xf32>
    %103 = tpu.concatenate %101, %102 in 1 : vector<8x1xf32>, vector<8x15xf32> -> vector<8x16xf32>
    %104 = vector.extract_strided_slice %100 {offsets = [0, 1], sizes = [8, 15], strides = [1, 1]} : vector<8x16xf32> to vector<8x15xf32>
    %cst_30 = arith.constant 0.000000e+00 : f32
    %105 = vector.broadcast %cst_30 : f32 to vector<8x1xf32>
    %106 = tpu.concatenate %104, %105 in 1 : vector<8x15xf32>, vector<8x1xf32> -> vector<8x16xf32>
    %107 = tpu.concatenate %103, %100, %106 in 0 : vector<8x16xf32>, vector<8x16xf32>, vector<8x16xf32> -> vector<24x16xf32>
    %108 = arith.truncf %107 : vector<24x16xf32> to vector<24x16xbf16>
    %c0_31 = arith.constant 0 : index
    %c0_32 = arith.constant 0 : index
    %109 = vector.load %arg7[%c0_31, %c0_32] : memref<8x24xbf16, #tpu.memory_space<vmem>>, vector<8x24xbf16>
    %cst_33 = arith.constant dense<0.000000e+00> : vector<8x16xf32>
    %110 = tpu.matmul %109, %108, %cst_33 {dimension_numbers = #tpu.dot_dimension_numbers<[1], [0], [0], [1], [0, 0, 1, 1], [], []>} : vector<8x24xbf16>, vector<24x16xbf16>, vector<8x16xf32> -> vector<8x16xf32>
    %111 = vector.extract_strided_slice %110 {offsets = [0, 0], sizes = [1, 16], strides = [1, 1]} : vector<8x16xf32> to vector<1x16xf32>
    %c0_34 = arith.constant 0 : index
    %c0_35 = arith.constant 0 : index
    %112 = vector.load %arg8[%c0_34, %c0_35] : memref<1x1xf32, #tpu.memory_space<vmem>>, vector<1x1xf32>
    %113 = vector.broadcast %112 : vector<1x1xf32> to vector<1x16xf32>
    %114 = arith.addf %111, %113 : vector<1x16xf32>
    %c0_36 = arith.constant 0 : index
    %c0_37 = arith.constant 0 : index
    %c0_38 = arith.constant 0 : index
    %115 = vector.load %arg2[%c0_36, %c0_37, %c0_38] : memref<1x8x16xf32, #tpu.memory_space<vmem>>, vector<1x8x16xf32>
    %116 = vector.shape_cast %115 : vector<1x8x16xf32> to vector<8x16xf32>
    %117 = vector.extract_strided_slice %116 {offsets = [0, 0], sizes = [4, 16], strides = [1, 1]} : vector<8x16xf32> to vector<4x16xf32>
    %118 = vector.extract_strided_slice %117 {offsets = [2, 0], sizes = [1, 16], strides = [1, 1]} : vector<4x16xf32> to vector<1x16xf32>
    %cst_39 = arith.constant 0.000000e+00 : f32
    %119 = vector.broadcast %cst_39 : f32 to vector<1x1xf32>
    %120 = vector.extract_strided_slice %118 {offsets = [0, 0], sizes = [1, 15], strides = [1, 1]} : vector<1x16xf32> to vector<1x15xf32>
    %121 = tpu.concatenate %119, %120 in 1 : vector<1x1xf32>, vector<1x15xf32> -> vector<1x16xf32>
    %122 = vector.extract_strided_slice %117 {offsets = [3, 0], sizes = [1, 16], strides = [1, 1]} : vector<4x16xf32> to vector<1x16xf32>
    %cst_40 = arith.constant 0.000000e+00 : f32
    %123 = vector.broadcast %cst_40 : f32 to vector<1x1xf32>
    %124 = vector.extract_strided_slice %122 {offsets = [0, 0], sizes = [1, 15], strides = [1, 1]} : vector<1x16xf32> to vector<1x15xf32>
    %125 = tpu.concatenate %123, %124 in 1 : vector<1x1xf32>, vector<1x15xf32> -> vector<1x16xf32>
    %126 = vector.extract_strided_slice %117 {offsets = [0, 0], sizes = [1, 16], strides = [1, 1]} : vector<4x16xf32> to vector<1x16xf32>
    %127 = vector.extract_strided_slice %117 {offsets = [1, 0], sizes = [1, 16], strides = [1, 1]} : vector<4x16xf32> to vector<1x16xf32>
    %128 = vector.extract_strided_slice %117 {offsets = [2, 0], sizes = [1, 16], strides = [1, 1]} : vector<4x16xf32> to vector<1x16xf32>
    %129 = vector.extract_strided_slice %117 {offsets = [3, 0], sizes = [1, 16], strides = [1, 1]} : vector<4x16xf32> to vector<1x16xf32>
    %130 = vector.extract_strided_slice %117 {offsets = [0, 0], sizes = [1, 16], strides = [1, 1]} : vector<4x16xf32> to vector<1x16xf32>
    %131 = vector.extract_strided_slice %130 {offsets = [0, 1], sizes = [1, 15], strides = [1, 1]} : vector<1x16xf32> to vector<1x15xf32>
    %cst_41 = arith.constant 0.000000e+00 : f32
    %132 = vector.broadcast %cst_41 : f32 to vector<1x1xf32>
    %133 = tpu.concatenate %131, %132 in 1 : vector<1x15xf32>, vector<1x1xf32> -> vector<1x16xf32>
    %cst_42 = arith.constant 0.000000e+00 : f32
    %134 = vector.broadcast %cst_42 : f32 to vector<8x16xf32>
    %cst_43 = arith.constant 0.000000e+00 : f32
    %135 = vector.broadcast %cst_43 : f32 to vector<8x16xf32>
    %c0_44 = arith.constant 0 : index
    %c0_45 = arith.constant 0 : index
    %136 = vector.load %arg3[%c0_44, %c0_45] : memref<8x5xf32, #tpu.memory_space<vmem>>, vector<8x1xf32>
    %137 = vector.broadcast %136 : vector<8x1xf32> to vector<8x16xf32>
    %138 = vector.broadcast %121 : vector<1x16xf32> to vector<8x16xf32>
    %139 = arith.mulf %137, %138 : vector<8x16xf32>
    %140 = arith.addf %134, %139 : vector<8x16xf32>
    %141 = vector.broadcast %136 : vector<8x1xf32> to vector<8x16xf32>
    %142 = vector.broadcast %126 : vector<1x16xf32> to vector<8x16xf32>
    %143 = arith.mulf %141, %142 : vector<8x16xf32>
    %144 = arith.addf %135, %143 : vector<8x16xf32>
    %c0_46 = arith.constant 0 : index
    %c1_47 = arith.constant 1 : index
    %145 = vector.load %arg3[%c0_46, %c1_47] : memref<8x5xf32, #tpu.memory_space<vmem>>, vector<8x1xf32>
    %146 = vector.broadcast %145 : vector<8x1xf32> to vector<8x16xf32>
    %147 = vector.broadcast %125 : vector<1x16xf32> to vector<8x16xf32>
    %148 = arith.mulf %146, %147 : vector<8x16xf32>
    %149 = arith.addf %140, %148 : vector<8x16xf32>
    %150 = vector.broadcast %145 : vector<8x1xf32> to vector<8x16xf32>
    %151 = vector.broadcast %127 : vector<1x16xf32> to vector<8x16xf32>
    %152 = arith.mulf %150, %151 : vector<8x16xf32>
    %153 = arith.addf %144, %152 : vector<8x16xf32>
    %c0_48 = arith.constant 0 : index
    %c2_49 = arith.constant 2 : index
    %154 = vector.load %arg3[%c0_48, %c2_49] : memref<8x5xf32, #tpu.memory_space<vmem>>, vector<8x1xf32>
    %155 = vector.broadcast %154 : vector<8x1xf32> to vector<8x16xf32>
    %156 = vector.broadcast %126 : vector<1x16xf32> to vector<8x16xf32>
    %157 = arith.mulf %155, %156 : vector<8x16xf32>
    %158 = arith.addf %149, %157 : vector<8x16xf32>
    %159 = vector.broadcast %154 : vector<8x1xf32> to vector<8x16xf32>
    %160 = vector.broadcast %128 : vector<1x16xf32> to vector<8x16xf32>
    %161 = arith.mulf %159, %160 : vector<8x16xf32>
    %162 = arith.addf %153, %161 : vector<8x16xf32>
    %c0_50 = arith.constant 0 : index
    %c3_51 = arith.constant 3 : index
    %163 = vector.load %arg3[%c0_50, %c3_51] : memref<8x5xf32, #tpu.memory_space<vmem>>, vector<8x1xf32>
    %164 = vector.broadcast %163 : vector<8x1xf32> to vector<8x16xf32>
    %165 = vector.broadcast %127 : vector<1x16xf32> to vector<8x16xf32>
    %166 = arith.mulf %164, %165 : vector<8x16xf32>
    %167 = arith.addf %158, %166 : vector<8x16xf32>
    %168 = vector.broadcast %163 : vector<8x1xf32> to vector<8x16xf32>
    %169 = vector.broadcast %129 : vector<1x16xf32> to vector<8x16xf32>
    %170 = arith.mulf %168, %169 : vector<8x16xf32>
    %171 = arith.addf %162, %170 : vector<8x16xf32>
    %c0_52 = arith.constant 0 : index
    %c4_53 = arith.constant 4 : index
    %172 = vector.load %arg3[%c0_52, %c4_53] : memref<8x5xf32, #tpu.memory_space<vmem>>, vector<8x1xf32>
    %173 = vector.broadcast %172 : vector<8x1xf32> to vector<8x16xf32>
    %174 = vector.broadcast %128 : vector<1x16xf32> to vector<8x16xf32>
    %175 = arith.mulf %173, %174 : vector<8x16xf32>
    %176 = arith.addf %167, %175 : vector<8x16xf32>
    %177 = vector.broadcast %172 : vector<8x1xf32> to vector<8x16xf32>
    %178 = vector.broadcast %133 : vector<1x16xf32> to vector<8x16xf32>
    %179 = arith.mulf %177, %178 : vector<8x16xf32>
    %180 = arith.addf %171, %179 : vector<8x16xf32>
    %c0_54 = arith.constant 0 : index
    %c0_55 = arith.constant 0 : index
    %181 = vector.load %arg4[%c0_54, %c0_55] : memref<8x1xf32, #tpu.memory_space<vmem>>, vector<8x1xf32>
    %182 = vector.broadcast %181 : vector<8x1xf32> to vector<8x16xf32>
    %183 = arith.addf %176, %182 : vector<8x16xf32>
    %cst_56 = arith.constant 0.000000e+00 : f32
    %184 = vector.broadcast %cst_56 : f32 to vector<8x16xf32>
    %185 = arith.cmpf ogt, %183, %184 : vector<8x16xf32>
    %cst_57 = arith.constant 1.000000e-01 : f32
    %186 = vector.broadcast %cst_57 : f32 to vector<8x16xf32>
    %187 = arith.mulf %186, %183 : vector<8x16xf32>
    %188 = arith.select %185, %183, %187 : vector<8x16xi1>, vector<8x16xf32>
    %c0_58 = arith.constant 0 : index
    %c0_59 = arith.constant 0 : index
    %189 = vector.load %arg4[%c0_58, %c0_59] : memref<8x1xf32, #tpu.memory_space<vmem>>, vector<8x1xf32>
    %190 = vector.broadcast %189 : vector<8x1xf32> to vector<8x16xf32>
    %191 = arith.addf %180, %190 : vector<8x16xf32>
    %cst_60 = arith.constant 0.000000e+00 : f32
    %192 = vector.broadcast %cst_60 : f32 to vector<8x16xf32>
    %193 = arith.cmpf ogt, %191, %192 : vector<8x16xf32>
    %cst_61 = arith.constant 1.000000e-01 : f32
    %194 = vector.broadcast %cst_61 : f32 to vector<8x16xf32>
    %195 = arith.mulf %194, %191 : vector<8x16xf32>
    %196 = arith.select %193, %191, %195 : vector<8x16xi1>, vector<8x16xf32>
    %197 = tpu.concatenate %188, %196 in 0 : vector<8x16xf32>, vector<8x16xf32> -> vector<16x16xf32>
    %cst_62 = arith.constant 0.000000e+00 : f32
    %198 = vector.broadcast %cst_62 : f32 to vector<16x1xf32>
    %199 = vector.extract_strided_slice %197 {offsets = [0, 0], sizes = [16, 15], strides = [1, 1]} : vector<16x16xf32> to vector<16x15xf32>
    %200 = tpu.concatenate %198, %199 in 1 : vector<16x1xf32>, vector<16x15xf32> -> vector<16x16xf32>
    %201 = vector.extract_strided_slice %197 {offsets = [0, 0], sizes = [8, 16], strides = [1, 1]} : vector<16x16xf32> to vector<8x16xf32>
    %202 = vector.extract_strided_slice %201 {offsets = [0, 1], sizes = [8, 15], strides = [1, 1]} : vector<8x16xf32> to vector<8x15xf32>
    %cst_63 = arith.constant 0.000000e+00 : f32
    %203 = vector.broadcast %cst_63 : f32 to vector<8x1xf32>
    %204 = tpu.concatenate %202, %203 in 1 : vector<8x15xf32>, vector<8x1xf32> -> vector<8x16xf32>
    %205 = tpu.concatenate %200, %197, %204 in 0 : vector<16x16xf32>, vector<16x16xf32>, vector<8x16xf32> -> vector<40x16xf32>
    %206 = arith.truncf %205 : vector<40x16xf32> to vector<40x16xbf16>
    %c0_64 = arith.constant 0 : index
    %c0_65 = arith.constant 0 : index
    %207 = vector.load %arg5[%c0_64, %c0_65] : memref<8x40xbf16, #tpu.memory_space<vmem>>, vector<8x40xbf16>
    %cst_66 = arith.constant dense<0.000000e+00> : vector<8x16xf32>
    %208 = tpu.matmul %207, %206, %cst_66 {dimension_numbers = #tpu.dot_dimension_numbers<[1], [0], [0], [1], [0, 0, 1, 1], [], []>} : vector<8x40xbf16>, vector<40x16xbf16>, vector<8x16xf32> -> vector<8x16xf32>
    %c0_67 = arith.constant 0 : index
    %c0_68 = arith.constant 0 : index
    %209 = vector.load %arg6[%c0_67, %c0_68] : memref<8x1xf32, #tpu.memory_space<vmem>>, vector<8x1xf32>
    %210 = vector.broadcast %209 : vector<8x1xf32> to vector<8x16xf32>
    %211 = arith.addf %208, %210 : vector<8x16xf32>
    %cst_69 = arith.constant 0.000000e+00 : f32
    %212 = vector.broadcast %cst_69 : f32 to vector<8x16xf32>
    %213 = arith.cmpf ogt, %211, %212 : vector<8x16xf32>
    %cst_70 = arith.constant 1.000000e-01 : f32
    %214 = vector.broadcast %cst_70 : f32 to vector<8x16xf32>
    %215 = arith.mulf %214, %211 : vector<8x16xf32>
    %216 = arith.select %213, %211, %215 : vector<8x16xi1>, vector<8x16xf32>
    %cst_71 = arith.constant 0.000000e+00 : f32
    %217 = vector.broadcast %cst_71 : f32 to vector<8x1xf32>
    %218 = vector.extract_strided_slice %216 {offsets = [0, 0], sizes = [8, 15], strides = [1, 1]} : vector<8x16xf32> to vector<8x15xf32>
    %219 = tpu.concatenate %217, %218 in 1 : vector<8x1xf32>, vector<8x15xf32> -> vector<8x16xf32>
    %220 = vector.extract_strided_slice %216 {offsets = [0, 1], sizes = [8, 15], strides = [1, 1]} : vector<8x16xf32> to vector<8x15xf32>
    %cst_72 = arith.constant 0.000000e+00 : f32
    %221 = vector.broadcast %cst_72 : f32 to vector<8x1xf32>
    %222 = tpu.concatenate %220, %221 in 1 : vector<8x15xf32>, vector<8x1xf32> -> vector<8x16xf32>
    %223 = tpu.concatenate %219, %216, %222 in 0 : vector<8x16xf32>, vector<8x16xf32>, vector<8x16xf32> -> vector<24x16xf32>
    %224 = arith.truncf %223 : vector<24x16xf32> to vector<24x16xbf16>
    %c0_73 = arith.constant 0 : index
    %c0_74 = arith.constant 0 : index
    %225 = vector.load %arg7[%c0_73, %c0_74] : memref<8x24xbf16, #tpu.memory_space<vmem>>, vector<8x24xbf16>
    %cst_75 = arith.constant dense<0.000000e+00> : vector<8x16xf32>
    %226 = tpu.matmul %225, %224, %cst_75 {dimension_numbers = #tpu.dot_dimension_numbers<[1], [0], [0], [1], [0, 0, 1, 1], [], []>} : vector<8x24xbf16>, vector<24x16xbf16>, vector<8x16xf32> -> vector<8x16xf32>
    %227 = vector.extract_strided_slice %226 {offsets = [0, 0], sizes = [1, 16], strides = [1, 1]} : vector<8x16xf32> to vector<1x16xf32>
    %c0_76 = arith.constant 0 : index
    %c0_77 = arith.constant 0 : index
    %228 = vector.load %arg8[%c0_76, %c0_77] : memref<1x1xf32, #tpu.memory_space<vmem>>, vector<1x1xf32>
    %229 = vector.broadcast %228 : vector<1x1xf32> to vector<1x16xf32>
    %230 = arith.addf %227, %229 : vector<1x16xf32>
    %231 = arith.subf %81, %197 : vector<16x16xf32>
    %232 = math.absf %231 : vector<16x16xf32>
    %cst_78 = arith.constant dense<0.000000e+00> : vector<16xf32>
    %233 = vector.multi_reduction <add>, %232, %cst_78 [0] : vector<16x16xf32> to vector<16xf32>
    %234 = vector.shape_cast %233 : vector<16xf32> to vector<1x16xf32>
    %235 = arith.subf %100, %216 : vector<8x16xf32>
    %236 = math.absf %235 : vector<8x16xf32>
    %cst_79 = arith.constant dense<0.000000e+00> : vector<16xf32>
    %237 = vector.multi_reduction <add>, %236, %cst_79 [0] : vector<8x16xf32> to vector<16xf32>
    %238 = vector.shape_cast %237 : vector<16xf32> to vector<1x16xf32>
    %cst_80 = arith.constant 0.000000e+00 : f32
    %239 = vector.broadcast %cst_80 : f32 to vector<4x16xf32>
    %240 = tpu.concatenate %114, %230, %234, %238, %239 in 0 : vector<1x16xf32>, vector<1x16xf32>, vector<1x16xf32>, vector<1x16xf32>, vector<4x16xf32> -> vector<8x16xf32>
    %c0_81 = arith.constant 0 : index
    %c0_82 = arith.constant 0 : index
    %c0_83 = arith.constant 0 : index
    %241 = vector.load %arg9[%c0_81, %c0_82, %c0_83] : memref<1x8x16xf32, #tpu.memory_space<vmem>>, vector<1x8x16xf32>
    %242 = vector.shape_cast %241 : vector<1x8x16xf32> to vector<8x16xf32>
    %243 = vector.shape_cast %240 : vector<8x16xf32> to vector<1x8x16xf32>
    tpu.vector_store %arg9[%c0_81, %c0_82, %c0_83], %243 {strides = array<i32>} : memref<1x8x16xf32, #tpu.memory_space<vmem>>, vector<1x8x16xf32>,
    return
  }
  func.func @transform_0(%arg0: i32) -> (i32, i32, i32) {
    %c0_i32 = arith.constant 0 : i32
    %c0_i32_0 = arith.constant 0 : i32
    %c0_i32_1 = arith.constant 0 : i32
    return %arg0, %c0_i32, %c0_i32_0 : i32, i32, i32
  }
  func.func @transform_1(%arg0: i32) -> (i32, i32, i32) {
    %c0_i32 = arith.constant 0 : i32
    %c0_i32_0 = arith.constant 0 : i32
    %c0_i32_1 = arith.constant 0 : i32
    return %arg0, %c0_i32, %c0_i32_0 : i32, i32, i32
  }
  func.func @transform_2(%arg0: i32) -> (i32, i32) {
    %c0_i32 = arith.constant 0 : i32
    %c0_i32_0 = arith.constant 0 : i32
    %c0_i32_1 = arith.constant 0 : i32
    return %c0_i32, %c0_i32_0 : i32, i32
  }
  func.func @transform_3(%arg0: i32) -> (i32, i32) {
    %c0_i32 = arith.constant 0 : i32
    %c0_i32_0 = arith.constant 0 : i32
    %c0_i32_1 = arith.constant 0 : i32
    return %c0_i32, %c0_i32_0 : i32, i32
  }
  func.func @transform_4(%arg0: i32) -> (i32, i32) {
    %c0_i32 = arith.constant 0 : i32
    %c0_i32_0 = arith.constant 0 : i32
    %c0_i32_1 = arith.constant 0 : i32
    return %c0_i32, %c0_i32_0 : i32, i32
  }
  func.func @transform_5(%arg0: i32) -> (i32, i32) {
    %c0_i32 = arith.constant 0 : i32
    %c0_i32_0 = arith.constant 0 : i32
    %c0_i32_1 = arith.constant 0 : i32
    return %c0_i32, %c0_i32_0 : i32, i32
  }
  func.func @transform_6(%arg0: i32) -> (i32, i32) {
    %c0_i32 = arith.constant 0 : i32
    %c0_i32_0 = arith.constant 0 : i32
    %c0_i32_1 = arith.constant 0 : i32
    return %c0_i32, %c0_i32_0 : i32, i32
  }
  func.func @transform_7(%arg0: i32) -> (i32, i32) {
    %c0_i32 = arith.constant 0 : i32
    %c0_i32_0 = arith.constant 0 : i32
    %c0_i32_1 = arith.constant 0 : i32
    return %c0_i32, %c0_i32_0 : i32, i32
  }
  func.func @transform_8(%arg0: i32) -> (i32, i32, i32) {
    %c0_i32 = arith.constant 0 : i32
    %c0_i32_0 = arith.constant 0 : i32
    %c0_i32_1 = arith.constant 0 : i32
    return %arg0, %c0_i32, %c0_i32_0 : i32, i32, i32
  }
}

module attributes {stable_mosaic.version = 11 : i64} {
  func.func @_gen_losses_kernel(%arg0: memref<2x8x16xf32, #tpu.memory_space<vmem>>, %arg1: memref<2x4x16xf32, #tpu.memory_space<vmem>>, %arg2: memref<2x8x16xf32, #tpu.memory_space<vmem>>, %arg3: memref<2x1x16xf32, #tpu.memory_space<vmem>>, %arg4: memref<8x8xf32, #tpu.memory_space<vmem>>, %arg5: memref<1xf32, #tpu.memory_space<smem>>, %arg6: memref<1x8xf32, #tpu.memory_space<smem>>) attributes {dimension_semantics = [], scalar_prefetch = 0 : i64, scratch_operands = 0 : i64, tpu.core_type = #tpu.core_type<tc>} {
    %c0 = arith.constant 0 : index
    %c0_0 = arith.constant 0 : index
    %c0_1 = arith.constant 0 : index
    %0 = vector.load %arg0[%c0, %c0_0, %c0_1] : memref<2x8x16xf32, #tpu.memory_space<vmem>>, vector<2x8x16xf32>
    %1 = vector.extract_strided_slice %0 {offsets = [0, 0, 0], sizes = [2, 1, 16], strides = [1, 1, 1]} : vector<2x8x16xf32> to vector<2x1x16xf32>
    %2 = vector.extract_strided_slice %0 {offsets = [0, 1, 0], sizes = [2, 1, 16], strides = [1, 1, 1]} : vector<2x8x16xf32> to vector<2x1x16xf32>
    %cst = arith.constant 1.000000e+00 : f32
    %3 = vector.broadcast %cst : f32 to vector<2x1x16xf32>
    %4 = arith.subf %3, %2 : vector<2x1x16xf32>
    %5 = arith.mulf %4, %4 : vector<2x1x16xf32>
    %6 = vector.shape_cast %5 : vector<2x1x16xf32> to vector<1x2x1x16xf32>
    %cst_2 = arith.constant dense<0.000000e+00> : vector<1xf32>
    %7 = vector.multi_reduction <add>, %6, %cst_2 [1, 2, 3] : vector<1x2x1x16xf32> to vector<1xf32>
    %8 = vector.shape_cast %7 : vector<1xf32> to vector<1x1x1x1xf32>
    %9 = vector.extract %8[0, 0, 0, 0] : f32 from vector<1x1x1x1xf32>
    %cst_3 = arith.constant 3.200000e+01 : f32
    %10 = arith.divf %9, %cst_3 : f32
    %11 = vector.extract_strided_slice %0 {offsets = [0, 2, 0], sizes = [2, 1, 16], strides = [1, 1, 1]} : vector<2x8x16xf32> to vector<2x1x16xf32>
    %12 = vector.shape_cast %11 : vector<2x1x16xf32> to vector<1x2x1x16xf32>
    %cst_4 = arith.constant dense<0.000000e+00> : vector<1xf32>
    %13 = vector.multi_reduction <add>, %12, %cst_4 [1, 2, 3] : vector<1x2x1x16xf32> to vector<1xf32>
    %14 = vector.shape_cast %13 : vector<1xf32> to vector<1x1x1x1xf32>
    %15 = vector.extract %14[0, 0, 0, 0] : f32 from vector<1x1x1x1xf32>
    %cst_5 = arith.constant 5.120000e+02 : f32
    %16 = arith.divf %15, %cst_5 : f32
    %17 = vector.extract_strided_slice %0 {offsets = [0, 3, 0], sizes = [2, 1, 16], strides = [1, 1, 1]} : vector<2x8x16xf32> to vector<2x1x16xf32>
    %18 = vector.shape_cast %17 : vector<2x1x16xf32> to vector<1x2x1x16xf32>
    %cst_6 = arith.constant dense<0.000000e+00> : vector<1xf32>
    %19 = vector.multi_reduction <add>, %18, %cst_6 [1, 2, 3] : vector<1x2x1x16xf32> to vector<1xf32>
    %20 = vector.shape_cast %19 : vector<1xf32> to vector<1x1x1x1xf32>
    %21 = vector.extract %20[0, 0, 0, 0] : f32 from vector<1x1x1x1xf32>
    %cst_7 = arith.constant 2.560000e+02 : f32
    %22 = arith.divf %21, %cst_7 : f32
    %23 = arith.addf %16, %22 : f32
    %cst_8 = arith.constant 2.000000e+00 : f32
    %24 = arith.mulf %cst_8, %23 : f32
    %c0_9 = arith.constant 0 : index
    %c0_10 = arith.constant 0 : index
    %c0_11 = arith.constant 0 : index
    %25 = vector.load %arg1[%c0_9, %c0_10, %c0_11] : memref<2x4x16xf32, #tpu.memory_space<vmem>>, vector<2x4x16xf32>
    %c0_12 = arith.constant 0 : index
    %c0_13 = arith.constant 0 : index
    %c0_14 = arith.constant 0 : index
    %26 = vector.load %arg2[%c0_12, %c0_13, %c0_14] : memref<2x8x16xf32, #tpu.memory_space<vmem>>, vector<2x8x16xf32>
    %27 = vector.extract_strided_slice %25 {offsets = [0, 0, 0], sizes = [1, 4, 16], strides = [1, 1, 1]} : vector<2x4x16xf32> to vector<1x4x16xf32>
    %28 = vector.shape_cast %27 : vector<1x4x16xf32> to vector<4x16xf32>
    %29 = vector.extract_strided_slice %28 {offsets = [0, 0], sizes = [4, 15], strides = [1, 1]} : vector<4x16xf32> to vector<4x15xf32>
    %30 = vector.extract_strided_slice %28 {offsets = [0, 1], sizes = [4, 15], strides = [1, 1]} : vector<4x16xf32> to vector<4x15xf32>
    %31 = tpu.concatenate %29, %30 in 0 : vector<4x15xf32>, vector<4x15xf32> -> vector<8x15xf32>
    %32 = vector.extract_strided_slice %25 {offsets = [1, 0, 0], sizes = [1, 4, 16], strides = [1, 1, 1]} : vector<2x4x16xf32> to vector<1x4x16xf32>
    %33 = vector.shape_cast %32 : vector<1x4x16xf32> to vector<4x16xf32>
    %34 = vector.extract_strided_slice %33 {offsets = [0, 0], sizes = [4, 15], strides = [1, 1]} : vector<4x16xf32> to vector<4x15xf32>
    %35 = vector.extract_strided_slice %33 {offsets = [0, 1], sizes = [4, 15], strides = [1, 1]} : vector<4x16xf32> to vector<4x15xf32>
    %36 = tpu.concatenate %34, %35 in 0 : vector<4x15xf32>, vector<4x15xf32> -> vector<8x15xf32>
    %37 = tpu.concatenate %31, %36 in 1 : vector<8x15xf32>, vector<8x15xf32> -> vector<8x30xf32>
    %38 = vector.extract_strided_slice %26 {offsets = [0, 0, 0], sizes = [1, 4, 16], strides = [1, 1, 1]} : vector<2x8x16xf32> to vector<1x4x16xf32>
    %39 = vector.shape_cast %38 : vector<1x4x16xf32> to vector<4x16xf32>
    %40 = vector.extract_strided_slice %39 {offsets = [0, 0], sizes = [4, 15], strides = [1, 1]} : vector<4x16xf32> to vector<4x15xf32>
    %41 = vector.extract_strided_slice %39 {offsets = [0, 1], sizes = [4, 15], strides = [1, 1]} : vector<4x16xf32> to vector<4x15xf32>
    %42 = tpu.concatenate %40, %41 in 0 : vector<4x15xf32>, vector<4x15xf32> -> vector<8x15xf32>
    %43 = vector.extract_strided_slice %26 {offsets = [1, 0, 0], sizes = [1, 4, 16], strides = [1, 1, 1]} : vector<2x8x16xf32> to vector<1x4x16xf32>
    %44 = vector.shape_cast %43 : vector<1x4x16xf32> to vector<4x16xf32>
    %45 = vector.extract_strided_slice %44 {offsets = [0, 0], sizes = [4, 15], strides = [1, 1]} : vector<4x16xf32> to vector<4x15xf32>
    %46 = vector.extract_strided_slice %44 {offsets = [0, 1], sizes = [4, 15], strides = [1, 1]} : vector<4x16xf32> to vector<4x15xf32>
    %47 = tpu.concatenate %45, %46 in 0 : vector<4x15xf32>, vector<4x15xf32> -> vector<8x15xf32>
    %48 = tpu.concatenate %42, %47 in 1 : vector<8x15xf32>, vector<8x15xf32> -> vector<8x30xf32>
    %c0_15 = arith.constant 0 : index
    %c0_16 = arith.constant 0 : index
    %49 = vector.load %arg4[%c0_15, %c0_16] : memref<8x8xf32, #tpu.memory_space<vmem>>, vector<8x8xf32>
    %cst_17 = arith.constant dense<0.000000e+00> : vector<8x30xf32>
    %50 = tpu.matmul %49, %37, %cst_17 {dimension_numbers = #tpu.dot_dimension_numbers<[1], [0], [0], [1], [0, 0, 1, 1], [], []>} : vector<8x8xf32>, vector<8x30xf32>, vector<8x30xf32> -> vector<8x30xf32>
    %c0_18 = arith.constant 0 : index
    %c0_19 = arith.constant 0 : index
    %51 = vector.load %arg4[%c0_18, %c0_19] : memref<8x8xf32, #tpu.memory_space<vmem>>, vector<8x8xf32>
    %cst_20 = arith.constant dense<0.000000e+00> : vector<8x30xf32>
    %52 = tpu.matmul %51, %48, %cst_20 {dimension_numbers = #tpu.dot_dimension_numbers<[1], [0], [0], [1], [0, 0, 1, 1], [], []>} : vector<8x8xf32>, vector<8x30xf32>, vector<8x30xf32> -> vector<8x30xf32>
    %53 = math.absf %52 : vector<8x30xf32>
    %cst_21 = arith.constant 9.99999974E-6 : f32
    %54 = vector.broadcast %cst_21 : f32 to vector<8x30xf32>
    %55 = arith.addf %53, %54 : vector<8x30xf32>
    %56 = math.log %55 : vector<8x30xf32>
    %57 = math.absf %50 : vector<8x30xf32>
    %cst_22 = arith.constant 9.99999974E-6 : f32
    %58 = vector.broadcast %cst_22 : f32 to vector<8x30xf32>
    %59 = arith.addf %57, %58 : vector<8x30xf32>
    %60 = math.log %59 : vector<8x30xf32>
    %61 = arith.subf %56, %60 : vector<8x30xf32>
    %62 = math.absf %61 : vector<8x30xf32>
    %63 = vector.shape_cast %62 : vector<8x30xf32> to vector<1x8x30xf32>
    %cst_23 = arith.constant dense<0.000000e+00> : vector<1xf32>
    %64 = vector.multi_reduction <add>, %63, %cst_23 [1, 2] : vector<1x8x30xf32> to vector<1xf32>
    %65 = vector.shape_cast %64 : vector<1xf32> to vector<1x1x1xf32>
    %66 = vector.extract %65[0, 0, 0] : f32 from vector<1x1x1xf32>
    %cst_24 = arith.constant 2.400000e+02 : f32
    %67 = arith.divf %66, %cst_24 : f32
    %c0_25 = arith.constant 0 : index
    %68 = memref.load %arg5[%c0_25] : memref<1xf32, #tpu.memory_space<smem>>
    %69 = arith.subf %1, %2 : vector<2x1x16xf32>
    %70 = vector.broadcast %68 : f32 to vector<2x1x16xf32>
    %71 = arith.cmpf olt, %69, %70 : vector<2x1x16xf32>
    %72 = arith.extui %71 : vector<2x1x16xi1> to vector<2x1x16xi32>
    %73 = arith.sitofp %72 : vector<2x1x16xi32> to vector<2x1x16xf32>
    %74 = vector.shape_cast %73 : vector<2x1x16xf32> to vector<1x2x1x16xf32>
    %cst_26 = arith.constant dense<0.000000e+00> : vector<1xf32>
    %75 = vector.multi_reduction <add>, %74, %cst_26 [1, 2, 3] : vector<1x2x1x16xf32> to vector<1xf32>
    %76 = vector.shape_cast %75 : vector<1xf32> to vector<1x1x1x1xf32>
    %77 = vector.extract %76[0, 0, 0, 0] : f32 from vector<1x1x1x1xf32>
    %78 = vector.broadcast %68 : f32 to vector<2x1x16xf32>
    %79 = arith.subf %69, %78 : vector<2x1x16xf32>
    %80 = arith.mulf %79, %79 : vector<2x1x16xf32>
    %cst_27 = arith.constant 0.000000e+00 : f32
    %81 = vector.broadcast %cst_27 : f32 to vector<2x1x16xf32>
    %82 = arith.select %71, %80, %81 : vector<2x1x16xi1>, vector<2x1x16xf32>
    %cst_28 = arith.constant 0.000000e+00 : f32
    %83 = arith.cmpf ogt, %77, %cst_28 : f32
    %84 = vector.shape_cast %82 : vector<2x1x16xf32> to vector<1x2x1x16xf32>
    %cst_29 = arith.constant dense<0.000000e+00> : vector<1xf32>
    %85 = vector.multi_reduction <add>, %84, %cst_29 [1, 2, 3] : vector<1x2x1x16xf32> to vector<1xf32>
    %86 = vector.shape_cast %85 : vector<1xf32> to vector<1x1x1x1xf32>
    %87 = vector.extract %86[0, 0, 0, 0] : f32 from vector<1x1x1x1xf32>
    %cst_30 = arith.constant 1.000000e+00 : f32
    %88 = arith.maximumf %77, %cst_30 : f32
    %89 = arith.divf %87, %88 : f32
    %cst_31 = arith.constant 0.000000e+00 : f32
    %90 = arith.select %83, %89, %cst_31 : f32
    %cst_32 = arith.constant 4.000000e-02 : f32
    %91 = arith.subf %cst_32, %90 : f32
    %cst_33 = arith.constant 0.000000e+00 : f32
    %92 = arith.maximumf %91, %cst_33 : f32
    %cst_34 = arith.constant 4.000000e-02 : f32
    %93 = arith.subf %cst_34, %92 : f32
    %94 = vector.extract_strided_slice %26 {offsets = [0, 4, 0], sizes = [2, 1, 16], strides = [1, 1, 1]} : vector<2x8x16xf32> to vector<2x1x16xf32>
    %c0_35 = arith.constant 0 : index
    %c0_36 = arith.constant 0 : index
    %c0_37 = arith.constant 0 : index
    %95 = vector.load %arg3[%c0_35, %c0_36, %c0_37] : memref<2x1x16xf32, #tpu.memory_space<vmem>>, vector<2x1x16xf32>
    %96 = arith.subf %94, %95 : vector<2x1x16xf32>
    %97 = math.absf %96 : vector<2x1x16xf32>
    %98 = vector.shape_cast %97 : vector<2x1x16xf32> to vector<1x2x1x16xf32>
    %cst_38 = arith.constant dense<0.000000e+00> : vector<1xf32>
    %99 = vector.multi_reduction <add>, %98, %cst_38 [1, 2, 3] : vector<1x2x1x16xf32> to vector<1xf32>
    %100 = vector.shape_cast %99 : vector<1xf32> to vector<1x1x1x1xf32>
    %101 = vector.extract %100[0, 0, 0, 0] : f32 from vector<1x1x1x1xf32>
    %cst_39 = arith.constant 3.200000e+01 : f32
    %102 = arith.divf %101, %cst_39 : f32
    %cst_40 = arith.constant 2.000000e+00 : f32
    %103 = arith.mulf %cst_40, %24 : f32
    %104 = arith.addf %10, %103 : f32
    %cst_41 = arith.constant 4.500000e+01 : f32
    %105 = arith.mulf %cst_41, %67 : f32
    %106 = arith.addf %104, %105 : f32
    %cst_42 = arith.constant 1.000000e+00 : f32
    %107 = arith.mulf %cst_42, %93 : f32
    %108 = arith.addf %106, %107 : f32
    %109 = arith.addf %108, %102 : f32
    %c0_43 = arith.constant 0 : index
    %c0_44 = arith.constant 0 : index
    %110 = memref.load %arg6[%c0_43, %c0_44] : memref<1x8xf32, #tpu.memory_space<smem>>
    memref.store %109, %arg6[%c0_43, %c0_44] : memref<1x8xf32, #tpu.memory_space<smem>>
    %c0_45 = arith.constant 0 : index
    %c1 = arith.constant 1 : index
    %111 = memref.load %arg6[%c0_45, %c1] : memref<1x8xf32, #tpu.memory_space<smem>>
    memref.store %10, %arg6[%c0_45, %c1] : memref<1x8xf32, #tpu.memory_space<smem>>
    %c0_46 = arith.constant 0 : index
    %c2 = arith.constant 2 : index
    %112 = memref.load %arg6[%c0_46, %c2] : memref<1x8xf32, #tpu.memory_space<smem>>
    memref.store %24, %arg6[%c0_46, %c2] : memref<1x8xf32, #tpu.memory_space<smem>>
    %c0_47 = arith.constant 0 : index
    %c3 = arith.constant 3 : index
    %113 = memref.load %arg6[%c0_47, %c3] : memref<1x8xf32, #tpu.memory_space<smem>>
    memref.store %67, %arg6[%c0_47, %c3] : memref<1x8xf32, #tpu.memory_space<smem>>
    %c0_48 = arith.constant 0 : index
    %c4 = arith.constant 4 : index
    %114 = memref.load %arg6[%c0_48, %c4] : memref<1x8xf32, #tpu.memory_space<smem>>
    memref.store %93, %arg6[%c0_48, %c4] : memref<1x8xf32, #tpu.memory_space<smem>>
    %c0_49 = arith.constant 0 : index
    %c5 = arith.constant 5 : index
    %115 = memref.load %arg6[%c0_49, %c5] : memref<1x8xf32, #tpu.memory_space<smem>>
    memref.store %102, %arg6[%c0_49, %c5] : memref<1x8xf32, #tpu.memory_space<smem>>
    %cst_50 = arith.constant 0.000000e+00 : f32
    %c0_51 = arith.constant 0 : index
    %c6 = arith.constant 6 : index
    %116 = memref.load %arg6[%c0_51, %c6] : memref<1x8xf32, #tpu.memory_space<smem>>
    memref.store %cst_50, %arg6[%c0_51, %c6] : memref<1x8xf32, #tpu.memory_space<smem>>
    %cst_52 = arith.constant 0.000000e+00 : f32
    %c0_53 = arith.constant 0 : index
    %c7 = arith.constant 7 : index
    %117 = memref.load %arg6[%c0_53, %c7] : memref<1x8xf32, #tpu.memory_space<smem>>
    memref.store %cst_52, %arg6[%c0_53, %c7] : memref<1x8xf32, #tpu.memory_space<smem>>
    return
  }
}

</mosaic_0001>

<llo_original>
// kernel: _forward_generator.3
$region0: #{_forward_generator.3}
  #allocation0 [shape = 'u32[]', space=smem, size = 0x4, offset = 0x4, fixed_abs, tag = 'smem constant byte address 0x4 - core index']
  #allocation1 [shape = 'u32[144,128]{1,0:T(1,128)}', space=vmem, size = 0x12000, scoped, tag = 'internal scratch']
  %s0 = inlined_call_operand.vmem [shape: f32[2,8,16], index: 0, kind: input, shape index: {}]
  %s1 = inlined_call_operand.vmem [shape: bf16[16,24], index: 1, kind: input, shape index: {}]
  %s2 = inlined_call_operand.vmem [shape: f32[16,1], index: 2, kind: input, shape index: {}]
  %s3 = inlined_call_operand.vmem [shape: bf16[8,48], index: 3, kind: input, shape index: {}]
  %s4 = inlined_call_operand.vmem [shape: f32[8,1], index: 4, kind: input, shape index: {}]
  %s5 = inlined_call_operand.vmem [shape: f32[2,8,16], index: 5, kind: output, shape index: {}]
  %s6 = sld [smem:[#allocation0]]
  $region53: #{_forward_generator.3} parent=0
    _
  %s8 = ssub.s32 1, %s6
  %s9 = scalar_select 0, %s8, %s6
  loop: start=0, step=1, limit=4
  $region2: #{_forward_generator.3} parent=0 // loop_pre_header
    _
  $region3: #{_forward_generator.3} parent=0 // loop_header
    %s11 = sphi 0, %s15
    %p12 = scmp.ge.s32.totalorder %s11, 4
    %s21 = sphi 0, %s23
    %s24 = sphi 0, %s21
    %s25 = sphi 0, %s24
    %s41 = sphi 0, %s25
    %s45 = sphi 0, %s45
    %s47 = sphi 0, %s45
    %s48 = sphi 0, %s47
    %s62 = sphi 0, %s48
    %s66 = sphi 0, %s66
    %s68 = sphi 0, %s66
    %s69 = sphi 0, %s68
    %s83 = sphi 0, %s69
    %s87 = sphi 0, %s87
    %s89 = sphi 0, %s87
    %s90 = sphi 0, %s89
    %s104 = sphi 0, %s90
    %s108 = sphi 0, %s108
    %s110 = sphi 0, %s108
    %s111 = sphi 0, %s110
    %s125 = sphi 0, %s111
    %s131 = sphi 0, %s133
    %s134 = sphi 0, %s131
    %s135 = sphi 0, %s134
    %s151 = sphi 0, %s135
  $region4: #{_forward_generator.3} parent=0 // loop_header_branch
    %14 = sbr.rel (%p12) target = $region8
  $region5: #{_forward_generator.3} parent=0 // loop_body
    %s16 = ssub.s32 %s11, 1
    %s17 = ssub.s32 %s11, 2
    %s18 = sadd.s32 %s11, 1
    %s19 = ssub.s32 %s11, %s18
    %p20 = scmp.eq.s32.totalorder %s19, 0
    %s22 = sadd.s32 %s21, 1
    %s23 = scalar_select %p20, %s21, %s22
    %p26 = pneg %p20
    %p27 = scmp.eq.s32.totalorder %s11, 1
    %p28 = por %p26, %p27
    %p29 = scmp.ne.s32.totalorder %s21, %s24
    %p30 = scmp.eq.s32.totalorder %s11, 0
    %p31 = por %p29, %p30
    %p32 = scmp.ne.s32.totalorder %s21, %s24
    %p33 = scmp.eq.s32.totalorder %s16, 1
    %p34 = por %p32, %p33
    %p35 = scmp.ne.s32.totalorder %s24, %s25
    %p36 = scmp.eq.s32.totalorder %s16, 0
    %p37 = por %p35, %p36
    %p38 = scmp.ne.s32.totalorder %s24, %s25
    %p39 = scmp.eq.s32.totalorder %s17, 1
    %p40 = por %p38, %p39
    %p42 = scmp.ne.s32.totalorder %s25, %s41
    %p43 = scmp.eq.s32.totalorder %s17, 0
    %p44 = por %p42, %p43
    %s46 = sadd.s32 %s45, 1
    %p49 = scmp.eq.s32.totalorder %s11, 1
    %p50 = scmp.ne.s32.totalorder %s45, %s47
    %p51 = scmp.eq.s32.totalorder %s11, 0
    %p52 = por %p50, %p51
    %p53 = scmp.ne.s32.totalorder %s45, %s47
    %p54 = scmp.eq.s32.totalorder %s16, 1
    %p55 = por %p53, %p54
    %p56 = scmp.ne.s32.totalorder %s47, %s48
    %p57 = scmp.eq.s32.totalorder %s16, 0
    %p58 = por %p56, %p57
    %p59 = scmp.ne.s32.totalorder %s47, %s48
    %p60 = scmp.eq.s32.totalorder %s17, 1
    %p61 = por %p59, %p60
    %p63 = scmp.ne.s32.totalorder %s48, %s62
    %p64 = scmp.eq.s32.totalorder %s17, 0
    %p65 = por %p63, %p64
    %s67 = sadd.s32 %s66, 1
    %p70 = scmp.eq.s32.totalorder %s11, 1
    %p71 = scmp.ne.s32.totalorder %s66, %s68
    %p72 = scmp.eq.s32.totalorder %s11, 0
    %p73 = por %p71, %p72
    %p74 = scmp.ne.s32.totalorder %s66, %s68
    %p75 = scmp.eq.s32.totalorder %s16, 1
    %p76 = por %p74, %p75
    %p77 = scmp.ne.s32.totalorder %s68, %s69
    %p78 = scmp.eq.s32.totalorder %s16, 0
    %p79 = por %p77, %p78
    %p80 = scmp.ne.s32.totalorder %s68, %s69
    %p81 = scmp.eq.s32.totalorder %s17, 1
    %p82 = por %p80, %p81
    %p84 = scmp.ne.s32.totalorder %s69, %s83
    %p85 = scmp.eq.s32.totalorder %s17, 0
    %p86 = por %p84, %p85
    %s88 = sadd.s32 %s87, 1
    %p91 = scmp.eq.s32.totalorder %s11, 1
    %p92 = scmp.ne.s32.totalorder %s87, %s89
    %p93 = scmp.eq.s32.totalorder %s11, 0
    %p94 = por %p92, %p93
    %p95 = scmp.ne.s32.totalorder %s87, %s89
    %p96 = scmp.eq.s32.totalorder %s16, 1
    %p97 = por %p95, %p96
    %p98 = scmp.ne.s32.totalorder %s89, %s90
    %p99 = scmp.eq.s32.totalorder %s16, 0
    %p100 = por %p98, %p99
    %p101 = scmp.ne.s32.totalorder %s89, %s90
    %p102 = scmp.eq.s32.totalorder %s17, 1
    %p103 = por %p101, %p102
    %p105 = scmp.ne.s32.totalorder %s90, %s104
    %p106 = scmp.eq.s32.totalorder %s17, 0
    %p107 = por %p105, %p106
    %s109 = sadd.s32 %s108, 1
    %p112 = scmp.eq.s32.totalorder %s11, 1
    %p113 = scmp.ne.s32.totalorder %s108, %s110
    %p114 = scmp.eq.s32.totalorder %s11, 0
    %p115 = por %p113, %p114
    %p116 = scmp.ne.s32.totalorder %s108, %s110
    %p117 = scmp.eq.s32.totalorder %s16, 1
    %p118 = por %p116, %p117
    %p119 = scmp.ne.s32.totalorder %s110, %s111
    %p120 = scmp.eq.s32.totalorder %s16, 0
    %p121 = por %p119, %p120
    %p122 = scmp.ne.s32.totalorder %s110, %s111
    %p123 = scmp.eq.s32.totalorder %s17, 1
    %p124 = por %p122, %p123
    %p126 = scmp.ne.s32.totalorder %s111, %s125
    %p127 = scmp.eq.s32.totalorder %s17, 0
    %p128 = por %p126, %p127
    %s129 = ssub.s32 %s11, %s18
    %p130 = scmp.eq.s32.totalorder %s129, 0
    %s132 = sadd.s32 %s131, 1
    %s133 = scalar_select %p130, %s131, %s132
    %p136 = pneg %p130
    %p137 = scmp.eq.s32.totalorder %s11, 1
    %p138 = por %p136, %p137
    %p139 = scmp.ne.s32.totalorder %s131, %s134
    %p140 = scmp.eq.s32.totalorder %s11, 0
    %p141 = por %p139, %p140
    %p142 = scmp.ne.s32.totalorder %s131, %s134
    %p143 = scmp.eq.s32.totalorder %s16, 1
    %p144 = por %p142, %p143
    %p145 = scmp.ne.s32.totalorder %s134, %s135
    %p146 = scmp.eq.s32.totalorder %s16, 0
    %p147 = por %p145, %p146
    %p148 = scmp.ne.s32.totalorder %s134, %s135
    %p149 = scmp.eq.s32.totalorder %s17, 1
    %p150 = por %p148, %p149
    %p152 = scmp.ne.s32.totalorder %s135, %s151
    %p153 = scmp.eq.s32.totalorder %s17, 0
    %p154 = por %p152, %p153
    %p155 = scmp.le.s32.totalorder 1, %s11
    %p156 = scmp.lt.s32.totalorder %s11, 3
    %p157 = pnand %p155, %p156
    %p158 = pneg %p157
    // Predicated region
    $region9: #{_forward_generator.3} parent=5 // pred_check
      _
    $region10: #{_forward_generator.3} parent=5 // pred_check_branch
      %160 = sbr.rel (%p157) target = $region12
    $region11: #{_forward_generator.3} parent=5 // pred_region
      %s161 = ssub.s32 %s11, 1
      // Predicated region
      $region13: #{_forward_generator.3} parent=11 // pred_check
        %p162 = pneg %p58
      $region14: #{_forward_generator.3} parent=11 // pred_check_branch
        %164 = sbr.rel (%p162) target = $region16
      $region15: #{_forward_generator.3} parent=11 // pred_region
        _
      $region16: #{_forward_generator.3} parent=11 // pred_fallthru
        _
      // Predicated region
      $region17: #{_forward_generator.3} parent=11 // pred_check
        %p165 = pneg %p79
      $region18: #{_forward_generator.3} parent=11 // pred_check_branch
        %167 = sbr.rel (%p165) target = $region20
      $region19: #{_forward_generator.3} parent=11 // pred_region
        _
      $region20: #{_forward_generator.3} parent=11 // pred_fallthru
        _
      // Predicated region
      $region21: #{_forward_generator.3} parent=11 // pred_check
        %p168 = pneg %p100
      $region22: #{_forward_generator.3} parent=11 // pred_check_branch
        %170 = sbr.rel (%p168) target = $region24
      $region23: #{_forward_generator.3} parent=11 // pred_region
        _
      $region24: #{_forward_generator.3} parent=11 // pred_fallthru
        _
      // Predicated region
      $region25: #{_forward_generator.3} parent=11 // pred_check
        %p171 = pneg %p121
      $region26: #{_forward_generator.3} parent=11 // pred_check_branch
        %173 = sbr.rel (%p171) target = $region28
      $region27: #{_forward_generator.3} parent=11 // pred_region
        _
      $region28: #{_forward_generator.3} parent=11 // pred_fallthru
        _
    $region12: #{_forward_generator.3} parent=5 // pred_fallthru
      _
    %p174 = scmp.lt.s32.totalorder %s11, 2
    // Predicated region
    $region29: #{_forward_generator.3} parent=5 // pred_check
      %p175 = pneg %p174
    $region30: #{_forward_generator.3} parent=5 // pred_check_branch
      %177 = sbr.rel (%p175) target = $region32
    $region31: #{_forward_generator.3} parent=5 // pred_region
      // Predicated region
      $region33: #{_forward_generator.3} parent=31 // pred_check
        %p178 = pneg %p31
      $region34: #{_forward_generator.3} parent=31 // pred_check_branch
        %180 = sbr.rel (%p178) target = $region36
      $region35: #{_forward_generator.3} parent=31 // pred_region
        %p181 = scmp.lt.s32.totalorder %s11, 1
        %s182 = scalar_select %p181, %s11, 1
        %s183 = smul.addr %s182, 8
        %s184 = scalar_lea.vmem %s0, %s183
      $region36: #{_forward_generator.3} parent=31 // pred_fallthru
        _
    $region32: #{_forward_generator.3} parent=5 // pred_fallthru
      _
    %p185 = scmp.le.s32.totalorder 1, %s11
    %p186 = scmp.lt.s32.totalorder %s11, 3
    %p187 = pnand %p185, %p186
    %p188 = pneg %p187
    // Predicated region
    $region37: #{_forward_generator.3} parent=5 // pred_check
      _
    $region38: #{_forward_generator.3} parent=5 // pred_check_branch
      %190 = sbr.rel (%p187) target = $region40
    $region39: #{_forward_generator.3} parent=5 // pred_region
      %s191 = ssub.s32 %s11, 1
      %p192 = scmp.lt.s32.totalorder %s16, 1
      %s193 = scalar_select %p192, %s16, 1
      %s194 = smul.addr %s193, 8
      %s195 = scalar_lea.vmem %s0, %s194
      %p196 = pneg %p37
      %p197 = pneg %p34
      %p198 = pneg %p58
      %p199 = pneg %p55
      %p200 = pneg %p79
      %p201 = pneg %p76
      %p202 = pneg %p100
      %p203 = pneg %p97
      %p204 = pneg %p121
      %p205 = pneg %p118
      %p206 = pneg %p147
      %p207 = pneg %p144
      %p208 = scmp.lt.s32.totalorder %s16, 1
      %s209 = scalar_select %p208, %s16, 1
      %s210 = smul.addr %s209, 8
      %s211 = scalar_lea.vmem %s5, %s210
      %p212 = scmp.lt.s32.totalorder %s16, 1
      %s213 = scalar_select %p212, %s16, 1
      %s214 = smul.addr %s213, 8
      %s215 = scalar_lea.vmem %s0, %s214
      %p216 = scmp.lt.s32.totalorder %s16, 1
      %s217 = scalar_select %p216, %s16, 1
      %s218 = smul.addr %s217, 8
      %s219 = scalar_lea.vmem %s5, %s218
      %v221 = vld [vmem:[%s215] sm:$0xff]
      %223 = vrot.lane.b32.xlu0 %v221, 1
      %v224 = vpop.permute.xlu0 %223
      %vm226 = vcmask 7168
      %v227 = vsel %vm226, 0.0, %v224
      %228 = vrot.lane.b32.xlu0 %v221, 127
      %v229 = vpop.permute.xlu0 %228
      %vm231 = vcmask 121856
      %v232 = vsel %vm231, %v229, 0.0
      %v233 = vpack.c.bf16 %v221, %v227
      %v234 = vpack.c.bf16 %v232, %v232
      %v235 = vld [vmem:[%s1] sm:$0xf]
      %v236 = vld [vmem:[%s1 + $0x4] sm:$0xf]
      %v237 = vld [vmem:[%s2] sm:$0xff]
      %v238 = vld [vmem:[%s2 + $0x8] sm:$0xff]
      %240 = vset.pattern.permute.xlu0 0
      %241 = vperm.xlu0 %240, %v237
      %v242 = vpop.permute.xlu0 %241
      %245 = vset.pattern.permute.xlu0 0
      %246 = vperm.xlu0 %245, %v238
      %v247 = vpop.permute.xlu0 %246
      %v251 = vunpack.c.l.b16 %v235
      %v252 = vunpack.c.l.b16 %v236
      %v253 = vpack.c.b16 %v252, %v251
      %vm254 = vcmask 195584
      %v256 = vsel %vm254, %v253, 0
      %vm258 = vcmask 1043456
      %v260 = vsel %vm258, %v234, 0
      %262 = vmatprep.subr.bf16.mxu0 0
      %263 = vmatpush1.bf16.msra.mxu0 0
      %264 = vmatprep.subr.bf16.mxu0 0
      %265 = vmatpush1.bf16.msra.mxu0 0
      %266 = vmatprep.subr.bf16.mxu0 0
      %267 = vmatpush1.bf16.msra.mxu0 0
      %268 = vmatprep.subr.bf16.mxu0 0
      %269 = vmatpush1.bf16.msra.mxu0 0
      %270 = vmatprep.subr.bf16.mxu0 0
      %271 = vmatpush1.bf16.msra.mxu0 0
      %272 = vmatprep.subr.bf16.mxu0 0
      %273 = vmatpush1.bf16.msra.mxu0 0
      %274 = vmatprep.subr.bf16.mxu0 0
      %275 = vmatpush1.bf16.msra.mxu0 %v260
      %276 = vmatprep.subr.bf16.mxu0 0
      %277 = vmatpush1.bf16.msra.mxu0 %v233
      %278 = vmatprep.subr.bf16.mxu0 0
      %279 = vmatpush2.bf16.msra.mxu0 0
      %280 = vmatprep.subr.bf16.mxu0 0
      %281 = vmatpush2.bf16.msra.mxu0 0
      %282 = vmatprep.subr.bf16.mxu0 0
      %283 = vmatpush2.bf16.msra.mxu0 0
      %284 = vmatprep.subr.bf16.mxu0 0
      %285 = vmatpush2.bf16.msra.mxu0 0
      %286 = vmatprep.subr.bf16.mxu0 0
      %287 = vmatpush2.bf16.msra.mxu0 0
      %288 = vmatprep.subr.bf16.mxu0 0
      %289 = vmatpush2.bf16.msra.mxu0 0
      %290 = vmatprep.subr.bf16.mxu0 0
      %291 = vmatpush2.bf16.msra.mxu0 0
      %292 = vmatprep.subr.bf16.mxu0 0
      %293 = vmatpush2.bf16.msra.mxu0 0
      %294 = vmatprep.mubr.bf16.mxu0 0
      %295 = vmatmul.mubr.bf16.gmra.mxu0 %v256
      %v296 = vpop.f32.mrf.mxu0
      %v297 = vadd.f32 %v242, %v296
      %v298 = vpop.f32.mrf.mxu0
      %v299 = vpop.f32.mrf.mxu0
      %v300 = vadd.f32 %v247, %v299
      %v301 = vpop.f32.mrf.mxu0
      %302 = vdwg.mxu0
      %vm303 = vcmp.gt.f32.partialorder %v297, 0.0
      %vm304 = vcmp.gt.f32.partialorder %v300, 0.0
      %v305 = vmul.f32 %v297, 0.1
      %v306 = vmul.f32 %v300, 0.1
      %v307 = vsel %vm303, %v297, %v305
      %v308 = vsel %vm304, %v300, %v306
      %311 = vrot.lane.b32.xlu0 %v307, 1
      %v312 = vpop.permute.xlu0 %311
      %313 = vrot.lane.b32.xlu0 %v308, 1
      %v314 = vpop.permute.xlu0 %313
      %v317 = vsel %vm226, 0.0, %v312
      %v318 = vsel %vm226, 0.0, %v314
      %319 = vrot.lane.b32.xlu0 %v307, 127
      %v320 = vpop.permute.xlu0 %319
      %321 = vrot.lane.b32.xlu0 %v308, 127
      %v322 = vpop.permute.xlu0 %321
      %v325 = vsel %vm231, %v320, 0.0
      %v326 = vsel %vm231, %v322, 0.0
      %v327 = vpack.c.bf16 %v318, %v317
      %v328 = vpack.c.bf16 %v308, %v307
      %v329 = vpack.c.bf16 %v326, %v325
      %v330 = vld [vmem:[%s3] sm:$0xf]
      %v331 = vld [vmem:[%s4] sm:$0xff]
      %333 = vset.pattern.permute.xlu0 0
      %334 = vperm.xlu0 %333, %v331
      %v335 = vpop.permute.xlu0 %334
      %vm337 = vcmask 392192
      %v339 = vsel %vm337, %v330, 0
      %341 = vmatprep.subr.bf16.mxu0 0
      %342 = vmatpush1.bf16.msra.mxu0 0
      %343 = vmatprep.subr.bf16.mxu0 0
      %344 = vmatpush1.bf16.msra.mxu0 0
      %345 = vmatprep.subr.bf16.mxu0 0
      %346 = vmatpush1.bf16.msra.mxu0 0
      %347 = vmatprep.subr.bf16.mxu0 0
      %348 = vmatpush1.bf16.msra.mxu0 0
      %349 = vmatprep.subr.bf16.mxu0 0
      %350 = vmatpush1.bf16.msra.mxu0 0
      %351 = vmatprep.subr.bf16.mxu0 0
      %352 = vmatpush1.bf16.msra.mxu0 %v329
      %353 = vmatprep.subr.bf16.mxu0 0
      %354 = vmatpush1.bf16.msra.mxu0 %v328
      %355 = vmatprep.subr.bf16.mxu0 0
      %356 = vmatpush1.bf16.msra.mxu0 %v327
      %357 = vmatprep.subr.bf16.mxu0 0
      %358 = vmatpush2.bf16.msra.mxu0 0
      %359 = vmatprep.subr.bf16.mxu0 0
      %360 = vmatpush2.bf16.msra.mxu0 0
      %361 = vmatprep.subr.bf16.mxu0 0
      %362 = vmatpush2.bf16.msra.mxu0 0
      %363 = vmatprep.subr.bf16.mxu0 0
      %364 = vmatpush2.bf16.msra.mxu0 0
      %365 = vmatprep.subr.bf16.mxu0 0
      %366 = vmatpush2.bf16.msra.mxu0 0
      %367 = vmatprep.subr.bf16.mxu0 0
      %368 = vmatpush2.bf16.msra.mxu0 0
      %369 = vmatprep.subr.bf16.mxu0 0
      %370 = vmatpush2.bf16.msra.mxu0 0
      %371 = vmatprep.subr.bf16.mxu0 0
      %372 = vmatpush2.bf16.msra.mxu0 0
      %373 = vmatprep.mubr.bf16.mxu0 0
      %374 = vmatmul.mubr.bf16.gmra.mxu0 %v339
      %v375 = vpop.f32.mrf.mxu0
      %v376 = vadd.f32 %v335, %v375
      %v377 = vpop.f32.mrf.mxu0
      %v378 = vpop.f32.mrf.mxu0
      %v379 = vpop.f32.mrf.mxu0
      %380 = vdwg.mxu0
      %v381 = vlaneseq
      %v382 = vshrl.u32 %v381, 7
      %vm383 = vcmp.lt.s32.totalorder %v382, 4
      %v384 = vtanh.pop %v376
      %v385 = vsel %vm383, %v384, %v376
      %vm386 = vcmask 130048
      %387 = vst.msk [vmem:[%s219] sm:$0xff] %vm386, %v385
      %p388 = scmp.lt.s32.totalorder %s16, 1
      %s389 = scalar_select %p388, %s16, 1
      %s390 = smul.addr %s389, 8
      %s391 = scalar_lea.vmem %s5, %s390
      // Predicated region
      $region41: #{_forward_generator.3} parent=39 // pred_check
        %p392 = pneg %p144
      $region42: #{_forward_generator.3} parent=39 // pred_check_branch
        %394 = sbr.rel (%p392) target = $region44
      $region43: #{_forward_generator.3} parent=39 // pred_region
        _
      $region44: #{_forward_generator.3} parent=39 // pred_fallthru
        _
    $region40: #{_forward_generator.3} parent=5 // pred_fallthru
      _
    %p395 = scmp.le.s32.totalorder 2, %s11
    // Predicated region
    $region45: #{_forward_generator.3} parent=5 // pred_check
      %p396 = pneg %p395
    $region46: #{_forward_generator.3} parent=5 // pred_check_branch
      %398 = sbr.rel (%p396) target = $region48
    $region47: #{_forward_generator.3} parent=5 // pred_region
      %s399 = ssub.s32 %s11, 2
      // Predicated region
      $region49: #{_forward_generator.3} parent=47 // pred_check
        %p400 = pneg %p150
      $region50: #{_forward_generator.3} parent=47 // pred_check_branch
        %402 = sbr.rel (%p400) target = $region52
      $region51: #{_forward_generator.3} parent=47 // pred_region
        %p403 = scmp.lt.s32.totalorder %s17, 1
        %s404 = scalar_select %p403, %s17, 1
        %s405 = smul.addr %s404, 8
        %s406 = scalar_lea.vmem %s5, %s405
      $region52: #{_forward_generator.3} parent=47 // pred_fallthru
        _
    $region48: #{_forward_generator.3} parent=5 // pred_fallthru
      _
  $region6: #{_forward_generator.3} parent=0 // loop_footer
    %s15 = sadd.s32 1, %s11
  $region7: #{_forward_generator.3} parent=0 // loop_footer_branch
    %10 = sbr.rel target = $region3
  $region8: #{_forward_generator.3} parent=0 // loop_exit
    _

// kernel: _forward_generator.4
$region0: #{_forward_generator.4}
  #allocation0 [shape = 'u32[]', space=smem, size = 0x4, offset = 0x4, fixed_abs, tag = 'smem constant byte address 0x4 - core index']
  #allocation1 [shape = 'u32[144,128]{1,0:T(1,128)}', space=vmem, size = 0x12000, scoped, tag = 'internal scratch']
  #allocation2 [shape = 'f32[1,1]{1,0:T(1,128)S(1)}', space=vmem, size = 0x200, scoped, tag = 'scoped memory for _forward_generator.4']
  %s0 = inlined_call_operand.vmem [shape: f32[2,4,16], index: 0, kind: input, shape index: {}]
  %s1 = inlined_call_operand.vmem [shape: f32[2,8,16], index: 1, kind: input, shape index: {}]
  %s2 = inlined_call_operand.vmem [shape: f32[8,5], index: 2, kind: input, shape index: {}]
  %s3 = inlined_call_operand.vmem [shape: f32[8,1], index: 3, kind: input, shape index: {}]
  %s4 = inlined_call_operand.vmem [shape: bf16[8,40], index: 4, kind: input, shape index: {}]
  %s5 = inlined_call_operand.vmem [shape: f32[8,1], index: 5, kind: input, shape index: {}]
  %s6 = inlined_call_operand.vmem [shape: bf16[8,24], index: 6, kind: input, shape index: {}]
  %s7 = inlined_call_operand.<no memory space> [shape: f32[1,1], index: 7, kind: input, shape index: {}]
  %s8 = inlined_call_operand.vmem [shape: f32[2,8,16], index: 8, kind: output, shape index: {}]
  %s9 = sld [smem:[#allocation0]]
  $region65: #{_forward_generator.4} parent=0
    _
  %s11 = ssub.s32 1, %s9
  %s12 = scalar_select 0, %s11, %s9
  %v13 = vstv %s7
  %14 = vst [vmem:[#allocation2] sm:$0x1] %v13
  loop: start=0, step=1, limit=4
  $region2: #{_forward_generator.4} parent=0 // loop_pre_header
    _
  $region3: #{_forward_generator.4} parent=0 // loop_header
    %s16 = sphi 0, %s20
    %p17 = scmp.ge.s32.totalorder %s16, 4
    %s26 = sphi 0, %s28
    %s29 = sphi 0, %s26
    %s30 = sphi 0, %s29
    %s46 = sphi 0, %s30
    %s52 = sphi 0, %s54
    %s55 = sphi 0, %s52
    %s56 = sphi 0, %s55
    %s72 = sphi 0, %s56
    %s76 = sphi 0, %s76
    %s78 = sphi 0, %s76
    %s79 = sphi 0, %s78
    %s93 = sphi 0, %s79
    %s97 = sphi 0, %s97
    %s99 = sphi 0, %s97
    %s100 = sphi 0, %s99
    %s114 = sphi 0, %s100
    %s118 = sphi 0, %s118
    %s120 = sphi 0, %s118
    %s121 = sphi 0, %s120
    %s135 = sphi 0, %s121
    %s139 = sphi 0, %s139
    %s141 = sphi 0, %s139
    %s142 = sphi 0, %s141
    %s156 = sphi 0, %s142
    %s160 = sphi 0, %s160
    %s162 = sphi 0, %s160
    %s163 = sphi 0, %s162
    %s177 = sphi 0, %s163
    %s181 = sphi 0, %s181
    %s183 = sphi 0, %s181
    %s184 = sphi 0, %s183
    %s198 = sphi 0, %s184
    %s204 = sphi 0, %s206
    %s207 = sphi 0, %s204
    %s208 = sphi 0, %s207
    %s224 = sphi 0, %s208
  $region4: #{_forward_generator.4} parent=0 // loop_header_branch
    %19 = sbr.rel (%p17) target = $region8
  $region5: #{_forward_generator.4} parent=0 // loop_body
    %s21 = ssub.s32 %s16, 1
    %s22 = ssub.s32 %s16, 2
    %s23 = sadd.s32 %s16, 1
    %s24 = ssub.s32 %s16, %s23
    %p25 = scmp.eq.s32.totalorder %s24, 0
    %s27 = sadd.s32 %s26, 1
    %s28 = scalar_select %p25, %s26, %s27
    %p31 = pneg %p25
    %p32 = scmp.eq.s32.totalorder %s16, 1
    %p33 = por %p31, %p32
    %p34 = scmp.ne.s32.totalorder %s26, %s29
    %p35 = scmp.eq.s32.totalorder %s16, 0
    %p36 = por %p34, %p35
    %p37 = scmp.ne.s32.totalorder %s26, %s29
    %p38 = scmp.eq.s32.totalorder %s21, 1
    %p39 = por %p37, %p38
    %p40 = scmp.ne.s32.totalorder %s29, %s30
    %p41 = scmp.eq.s32.totalorder %s21, 0
    %p42 = por %p40, %p41
    %p43 = scmp.ne.s32.totalorder %s29, %s30
    %p44 = scmp.eq.s32.totalorder %s22, 1
    %p45 = por %p43, %p44
    %p47 = scmp.ne.s32.totalorder %s30, %s46
    %p48 = scmp.eq.s32.totalorder %s22, 0
    %p49 = por %p47, %p48
    %s50 = ssub.s32 %s16, %s23
    %p51 = scmp.eq.s32.totalorder %s50, 0
    %s53 = sadd.s32 %s52, 1
    %s54 = scalar_select %p51, %s52, %s53
    %p57 = pneg %p51
    %p58 = scmp.eq.s32.totalorder %s16, 1
    %p59 = por %p57, %p58
    %p60 = scmp.ne.s32.totalorder %s52, %s55
    %p61 = scmp.eq.s32.totalorder %s16, 0
    %p62 = por %p60, %p61
    %p63 = scmp.ne.s32.totalorder %s52, %s55
    %p64 = scmp.eq.s32.totalorder %s21, 1
    %p65 = por %p63, %p64
    %p66 = scmp.ne.s32.totalorder %s55, %s56
    %p67 = scmp.eq.s32.totalorder %s21, 0
    %p68 = por %p66, %p67
    %p69 = scmp.ne.s32.totalorder %s55, %s56
    %p70 = scmp.eq.s32.totalorder %s22, 1
    %p71 = por %p69, %p70
    %p73 = scmp.ne.s32.totalorder %s56, %s72
    %p74 = scmp.eq.s32.totalorder %s22, 0
    %p75 = por %p73, %p74
    %s77 = sadd.s32 %s76, 1
    %p80 = scmp.eq.s32.totalorder %s16, 1
    %p81 = scmp.ne.s32.totalorder %s76, %s78
    %p82 = scmp.eq.s32.totalorder %s16, 0
    %p83 = por %p81, %p82
    %p84 = scmp.ne.s32.totalorder %s76, %s78
    %p85 = scmp.eq.s32.totalorder %s21, 1
    %p86 = por %p84, %p85
    %p87 = scmp.ne.s32.totalorder %s78, %s79
    %p88 = scmp.eq.s32.totalorder %s21, 0
    %p89 = por %p87, %p88
    %p90 = scmp.ne.s32.totalorder %s78, %s79
    %p91 = scmp.eq.s32.totalorder %s22, 1
    %p92 = por %p90, %p91
    %p94 = scmp.ne.s32.totalorder %s79, %s93
    %p95 = scmp.eq.s32.totalorder %s22, 0
    %p96 = por %p94, %p95
    %s98 = sadd.s32 %s97, 1
    %p101 = scmp.eq.s32.totalorder %s16, 1
    %p102 = scmp.ne.s32.totalorder %s97, %s99
    %p103 = scmp.eq.s32.totalorder %s16, 0
    %p104 = por %p102, %p103
    %p105 = scmp.ne.s32.totalorder %s97, %s99
    %p106 = scmp.eq.s32.totalorder %s21, 1
    %p107 = por %p105, %p106
    %p108 = scmp.ne.s32.totalorder %s99, %s100
    %p109 = scmp.eq.s32.totalorder %s21, 0
    %p110 = por %p108, %p109
    %p111 = scmp.ne.s32.totalorder %s99, %s100
    %p112 = scmp.eq.s32.totalorder %s22, 1
    %p113 = por %p111, %p112
    %p115 = scmp.ne.s32.totalorder %s100, %s114
    %p116 = scmp.eq.s32.totalorder %s22, 0
    %p117 = por %p115, %p116
    %s119 = sadd.s32 %s118, 1
    %p122 = scmp.eq.s32.totalorder %s16, 1
    %p123 = scmp.ne.s32.totalorder %s118, %s120
    %p124 = scmp.eq.s32.totalorder %s16, 0
    %p125 = por %p123, %p124
    %p126 = scmp.ne.s32.totalorder %s118, %s120
    %p127 = scmp.eq.s32.totalorder %s21, 1
    %p128 = por %p126, %p127
    %p129 = scmp.ne.s32.totalorder %s120, %s121
    %p130 = scmp.eq.s32.totalorder %s21, 0
    %p131 = por %p129, %p130
    %p132 = scmp.ne.s32.totalorder %s120, %s121
    %p133 = scmp.eq.s32.totalorder %s22, 1
    %p134 = por %p132, %p133
    %p136 = scmp.ne.s32.totalorder %s121, %s135
    %p137 = scmp.eq.s32.totalorder %s22, 0
    %p138 = por %p136, %p137
    %s140 = sadd.s32 %s139, 1
    %p143 = scmp.eq.s32.totalorder %s16, 1
    %p144 = scmp.ne.s32.totalorder %s139, %s141
    %p145 = scmp.eq.s32.totalorder %s16, 0
    %p146 = por %p144, %p145
    %p147 = scmp.ne.s32.totalorder %s139, %s141
    %p148 = scmp.eq.s32.totalorder %s21, 1
    %p149 = por %p147, %p148
    %p150 = scmp.ne.s32.totalorder %s141, %s142
    %p151 = scmp.eq.s32.totalorder %s21, 0
    %p152 = por %p150, %p151
    %p153 = scmp.ne.s32.totalorder %s141, %s142
    %p154 = scmp.eq.s32.totalorder %s22, 1
    %p155 = por %p153, %p154
    %p157 = scmp.ne.s32.totalorder %s142, %s156
    %p158 = scmp.eq.s32.totalorder %s22, 0
    %p159 = por %p157, %p158
    %s161 = sadd.s32 %s160, 1
    %p164 = scmp.eq.s32.totalorder %s16, 1
    %p165 = scmp.ne.s32.totalorder %s160, %s162
    %p166 = scmp.eq.s32.totalorder %s16, 0
    %p167 = por %p165, %p166
    %p168 = scmp.ne.s32.totalorder %s160, %s162
    %p169 = scmp.eq.s32.totalorder %s21, 1
    %p170 = por %p168, %p169
    %p171 = scmp.ne.s32.totalorder %s162, %s163
    %p172 = scmp.eq.s32.totalorder %s21, 0
    %p173 = por %p171, %p172
    %p174 = scmp.ne.s32.totalorder %s162, %s163
    %p175 = scmp.eq.s32.totalorder %s22, 1
    %p176 = por %p174, %p175
    %p178 = scmp.ne.s32.totalorder %s163, %s177
    %p179 = scmp.eq.s32.totalorder %s22, 0
    %p180 = por %p178, %p179
    %s182 = sadd.s32 %s181, 1
    %p185 = scmp.eq.s32.totalorder %s16, 1
    %p186 = scmp.ne.s32.totalorder %s181, %s183
    %p187 = scmp.eq.s32.totalorder %s16, 0
    %p188 = por %p186, %p187
    %p189 = scmp.ne.s32.totalorder %s181, %s183
    %p190 = scmp.eq.s32.totalorder %s21, 1
    %p191 = por %p189, %p190
    %p192 = scmp.ne.s32.totalorder %s183, %s184
    %p193 = scmp.eq.s32.totalorder %s21, 0
    %p194 = por %p192, %p193
    %p195 = scmp.ne.s32.totalorder %s183, %s184
    %p196 = scmp.eq.s32.totalorder %s22, 1
    %p197 = por %p195, %p196
    %p199 = scmp.ne.s32.totalorder %s184, %s198
    %p200 = scmp.eq.s32.totalorder %s22, 0
    %p201 = por %p199, %p200
    %s202 = ssub.s32 %s16, %s23
    %p203 = scmp.eq.s32.totalorder %s202, 0
    %s205 = sadd.s32 %s204, 1
    %s206 = scalar_select %p203, %s204, %s205
    %p209 = pneg %p203
    %p210 = scmp.eq.s32.totalorder %s16, 1
    %p211 = por %p209, %p210
    %p212 = scmp.ne.s32.totalorder %s204, %s207
    %p213 = scmp.eq.s32.totalorder %s16, 0
    %p214 = por %p212, %p213
    %p215 = scmp.ne.s32.totalorder %s204, %s207
    %p216 = scmp.eq.s32.totalorder %s21, 1
    %p217 = por %p215, %p216
    %p218 = scmp.ne.s32.totalorder %s207, %s208
    %p219 = scmp.eq.s32.totalorder %s21, 0
    %p220 = por %p218, %p219
    %p221 = scmp.ne.s32.totalorder %s207, %s208
    %p222 = scmp.eq.s32.totalorder %s22, 1
    %p223 = por %p221, %p222
    %p225 = scmp.ne.s32.totalorder %s208, %s224
    %p226 = scmp.eq.s32.totalorder %s22, 0
    %p227 = por %p225, %p226
    %p228 = scmp.le.s32.totalorder 1, %s16
    %p229 = scmp.lt.s32.totalorder %s16, 3
    %p230 = pnand %p228, %p229
    %p231 = pneg %p230
    // Predicated region
    $region9: #{_forward_generator.4} parent=5 // pred_check
      _
    $region10: #{_forward_generator.4} parent=5 // pred_check_branch
      %233 = sbr.rel (%p230) target = $region12
    $region11: #{_forward_generator.4} parent=5 // pred_region
      %s234 = ssub.s32 %s16, 1
      // Predicated region
      $region13: #{_forward_generator.4} parent=11 // pred_check
        %p235 = pneg %p89
      $region14: #{_forward_generator.4} parent=11 // pred_check_branch
        %237 = sbr.rel (%p235) target = $region16
      $region15: #{_forward_generator.4} parent=11 // pred_region
        _
      $region16: #{_forward_generator.4} parent=11 // pred_fallthru
        _
      // Predicated region
      $region17: #{_forward_generator.4} parent=11 // pred_check
        %p238 = pneg %p110
      $region18: #{_forward_generator.4} parent=11 // pred_check_branch
        %240 = sbr.rel (%p238) target = $region20
      $region19: #{_forward_generator.4} parent=11 // pred_region
        _
      $region20: #{_forward_generator.4} parent=11 // pred_fallthru
        _
      // Predicated region
      $region21: #{_forward_generator.4} parent=11 // pred_check
        %p241 = pneg %p131
      $region22: #{_forward_generator.4} parent=11 // pred_check_branch
        %243 = sbr.rel (%p241) target = $region24
      $region23: #{_forward_generator.4} parent=11 // pred_region
        _
      $region24: #{_forward_generator.4} parent=11 // pred_fallthru
        _
      // Predicated region
      $region25: #{_forward_generator.4} parent=11 // pred_check
        %p244 = pneg %p152
      $region26: #{_forward_generator.4} parent=11 // pred_check_branch
        %246 = sbr.rel (%p244) target = $region28
      $region27: #{_forward_generator.4} parent=11 // pred_region
        _
      $region28: #{_forward_generator.4} parent=11 // pred_fallthru
        _
      // Predicated region
      $region29: #{_forward_generator.4} parent=11 // pred_check
        %p247 = pneg %p173
      $region30: #{_forward_generator.4} parent=11 // pred_check_branch
        %249 = sbr.rel (%p247) target = $region32
      $region31: #{_forward_generator.4} parent=11 // pred_region
        _
      $region32: #{_forward_generator.4} parent=11 // pred_fallthru
        _
      // Predicated region
      $region33: #{_forward_generator.4} parent=11 // pred_check
        %p250 = pneg %p194
      $region34: #{_forward_generator.4} parent=11 // pred_check_branch
        %252 = sbr.rel (%p250) target = $region36
      $region35: #{_forward_generator.4} parent=11 // pred_region
        _
      $region36: #{_forward_generator.4} parent=11 // pred_fallthru
        _
    $region12: #{_forward_generator.4} parent=5 // pred_fallthru
      _
    %p253 = scmp.lt.s32.totalorder %s16, 2
    // Predicated region
    $region37: #{_forward_generator.4} parent=5 // pred_check
      %p254 = pneg %p253
    $region38: #{_forward_generator.4} parent=5 // pred_check_branch
      %256 = sbr.rel (%p254) target = $region40
    $region39: #{_forward_generator.4} parent=5 // pred_region
      // Predicated region
      $region41: #{_forward_generator.4} parent=39 // pred_check
        %p257 = pneg %p36
      $region42: #{_forward_generator.4} parent=39 // pred_check_branch
        %259 = sbr.rel (%p257) target = $region44
      $region43: #{_forward_generator.4} parent=39 // pred_region
        %p260 = scmp.lt.s32.totalorder %s16, 1
        %s261 = scalar_select %p260, %s16, 1
        %s262 = smul.addr %s261, 4
        %s263 = scalar_lea.vmem %s0, %s262
      $region44: #{_forward_generator.4} parent=39 // pred_fallthru
        _
      // Predicated region
      $region45: #{_forward_generator.4} parent=39 // pred_check
        %p264 = pneg %p62
      $region46: #{_forward_generator.4} parent=39 // pred_check_branch
        %266 = sbr.rel (%p264) target = $region48
      $region47: #{_forward_generator.4} parent=39 // pred_region
        %p267 = scmp.lt.s32.totalorder %s16, 1
        %s268 = scalar_select %p267, %s16, 1
        %s269 = smul.addr %s268, 8
        %s270 = scalar_lea.vmem %s1, %s269
      $region48: #{_forward_generator.4} parent=39 // pred_fallthru
        _
    $region40: #{_forward_generator.4} parent=5 // pred_fallthru
      _
    %p271 = scmp.le.s32.totalorder 1, %s16
    %p272 = scmp.lt.s32.totalorder %s16, 3
    %p273 = pnand %p271, %p272
    %p274 = pneg %p273
    // Predicated region
    $region49: #{_forward_generator.4} parent=5 // pred_check
      _
    $region50: #{_forward_generator.4} parent=5 // pred_check_branch
      %276 = sbr.rel (%p273) target = $region52
    $region51: #{_forward_generator.4} parent=5 // pred_region
      %s277 = ssub.s32 %s16, 1
      %p278 = scmp.lt.s32.totalorder %s21, 1
      %s279 = scalar_select %p278, %s21, 1
      %s280 = smul.addr %s279, 4
      %s281 = scalar_lea.vmem %s0, %s280
      %p282 = pneg %p42
      %p283 = pneg %p39
      %p284 = scmp.lt.s32.totalorder %s21, 1
      %s285 = scalar_select %p284, %s21, 1
      %s286 = smul.addr %s285, 8
      %s287 = scalar_lea.vmem %s1, %s286
      %p288 = pneg %p68
      %p289 = pneg %p65
      %p290 = pneg %p89
      %p291 = pneg %p86
      %p292 = pneg %p110
      %p293 = pneg %p107
      %p294 = pneg %p131
      %p295 = pneg %p128
      %p296 = pneg %p152
      %p297 = pneg %p149
      %p298 = pneg %p173
      %p299 = pneg %p170
      %p300 = pneg %p194
      %p301 = pneg %p191
      %p302 = pneg %p220
      %p303 = pneg %p217
      %p304 = scmp.lt.s32.totalorder %s21, 1
      %s305 = scalar_select %p304, %s21, 1
      %s306 = smul.addr %s305, 8
      %s307 = scalar_lea.vmem %s8, %s306
      %p308 = scmp.lt.s32.totalorder %s21, 1
      %s309 = scalar_select %p308, %s21, 1
      %s310 = smul.addr %s309, 4
      %s311 = scalar_lea.vmem %s0, %s310
      %p312 = scmp.lt.s32.totalorder %s21, 1
      %s313 = scalar_select %p312, %s21, 1
      %s314 = smul.addr %s313, 8
      %s315 = scalar_lea.vmem %s1, %s314
      %p316 = scmp.lt.s32.totalorder %s21, 1
      %s317 = scalar_select %p316, %s21, 1
      %s318 = smul.addr %s317, 8
      %s319 = scalar_lea.vmem %s8, %s318
      %v321 = vld [vmem:[%s311] sm:$0xf]
      %v323 = vrot.slane %v321, 2
      %324 = vrot.lane.b32.xlu0 %v323, 1
      %v325 = vpop.permute.xlu0 %324
      %vm327 = vcmask 7168
      %v328 = vsel %vm327, 0.0, %v325
      %v329 = vrot.slane %v321, 3
      %330 = vrot.lane.b32.xlu0 %v329, 1
      %v331 = vpop.permute.xlu0 %330
      %v333 = vsel %vm327, 0.0, %v331
      %334 = vrot.lane.b32.xlu0 %v321, 127
      %v335 = vpop.permute.xlu0 %334
      %vm337 = vcmask 121856
      %v338 = vsel %vm337, %v335, 0.0
      %v339 = vld [vmem:[%s2] sm:$0xff]
      %341 = vset.pattern.permute.xlu0 0
      %342 = vperm.xlu0 %341, %v339
      %v343 = vpop.permute.xlu0 %342
      %v345 = vlaneseq
      %v346 = vshrl.u32 %v345, 7
      %v347 = vsub.s32 0, %v346
      %v348 = vrot.slane %v328, %v347
      %v349 = vmul.f32 %v343, %v348
      %v350 = vadd.f32 %v349, 0.0
      %v351 = vlaneseq
      %v352 = vshrl.u32 %v351, 7
      %v353 = vsub.s32 0, %v352
      %v354 = vrot.slane %v321, %v353
      %v355 = vmul.f32 %v343, %v354
      %v356 = vadd.f32 %v355, 0.0
      %357 = vset.pattern.permute.xlu0 1
      %358 = vperm.xlu0 %357, %v339
      %v359 = vpop.permute.xlu0 %358
      %v361 = vlaneseq
      %v362 = vshrl.u32 %v361, 7
      %v363 = vsub.s32 0, %v362
      %v364 = vrot.slane %v333, %v363
      %v365 = vmul.f32 %v359, %v364
      %v366 = vadd.f32 %v350, %v365
      %v367 = vlaneseq
      %v368 = vshrl.u32 %v367, 7
      %v369 = vsub.s32 1, %v368
      %v370 = vrot.slane %v321, %v369
      %v371 = vmul.f32 %v359, %v370
      %v372 = vadd.f32 %v356, %v371
      %373 = vset.pattern.permute.xlu0 2
      %374 = vperm.xlu0 %373, %v339
      %v375 = vpop.permute.xlu0 %374
      %v377 = vmul.f32 %v375, %v354
      %v378 = vadd.f32 %v366, %v377
      %v379 = vlaneseq
      %v380 = vshrl.u32 %v379, 7
      %v381 = vsub.s32 2, %v380
      %v382 = vrot.slane %v321, %v381
      %v383 = vmul.f32 %v375, %v382
      %v384 = vadd.f32 %v372, %v383
      %385 = vset.pattern.permute.xlu0 3
      %386 = vperm.xlu0 %385, %v339
      %v387 = vpop.permute.xlu0 %386
      %v389 = vmul.f32 %v387, %v370
      %v390 = vadd.f32 %v378, %v389
      %v391 = vlaneseq
      %v392 = vshrl.u32 %v391, 7
      %v393 = vsub.s32 3, %v392
      %v394 = vrot.slane %v321, %v393
      %v395 = vmul.f32 %v387, %v394
      %v396 = vadd.f32 %v384, %v395
      %397 = vset.pattern.permute.xlu0 4
      %398 = vperm.xlu0 %397, %v339
      %v399 = vpop.permute.xlu0 %398
      %v401 = vmul.f32 %v399, %v382
      %v402 = vadd.f32 %v390, %v401
      %v403 = vlaneseq
      %v404 = vshrl.u32 %v403, 7
      %v405 = vsub.s32 0, %v404
      %v406 = vrot.slane %v338, %v405
      %v407 = vmul.f32 %v399, %v406
      %v408 = vadd.f32 %v396, %v407
      %v409 = vld [vmem:[%s3] sm:$0xff]
      %411 = vset.pattern.permute.xlu0 0
      %412 = vperm.xlu0 %411, %v409
      %v413 = vpop.permute.xlu0 %412
      %v415 = vadd.f32 %v402, %v413
      %vm416 = vcmp.gt.f32.partialorder %v415, 0.0
      %v417 = vmul.f32 %v415, 0.1
      %v418 = vsel %vm416, %v415, %v417
      %v419 = vadd.f32 %v408, %v413
      %vm420 = vcmp.gt.f32.partialorder %v419, 0.0
      %v421 = vmul.f32 %v419, 0.1
      %v422 = vsel %vm420, %v419, %v421
      %425 = vrot.lane.b32.xlu0 %v418, 1
      %v426 = vpop.permute.xlu0 %425
      %427 = vrot.lane.b32.xlu0 %v422, 1
      %v428 = vpop.permute.xlu0 %427
      %v431 = vsel %vm327, 0.0, %v426
      %v432 = vsel %vm327, 0.0, %v428
      %433 = vrot.lane.b32.xlu0 %v418, 127
      %v434 = vpop.permute.xlu0 %433
      %v436 = vsel %vm337, %v434, 0.0
      %v437 = vpack.c.bf16 %v432, %v431
      %v438 = vpack.c.bf16 %v422, %v418
      %v439 = vpack.c.bf16 %v436, %v436
      %v440 = vld [vmem:[%s4] sm:$0xf]
      %v441 = vld [vmem:[%s5] sm:$0xff]
      %443 = vset.pattern.permute.xlu0 0
      %444 = vperm.xlu0 %443, %v441
      %v445 = vpop.permute.xlu0 %444
      %vm447 = vcmask 326656
      %v449 = vsel %vm447, %v440, 0
      %vm451 = vcmask 1043456
      %v453 = vsel %vm451, %v439, 0
      %455 = vmatprep.subr.bf16.mxu0 0
      %456 = vmatpush1.bf16.msra.mxu0 0
      %457 = vmatprep.subr.bf16.mxu0 0
      %458 = vmatpush1.bf16.msra.mxu0 0
      %459 = vmatprep.subr.bf16.mxu0 0
      %460 = vmatpush1.bf16.msra.mxu0 0
      %461 = vmatprep.subr.bf16.mxu0 0
      %462 = vmatpush1.bf16.msra.mxu0 0
      %463 = vmatprep.subr.bf16.mxu0 0
      %464 = vmatpush1.bf16.msra.mxu0 0
      %465 = vmatprep.subr.bf16.mxu0 0
      %466 = vmatpush1.bf16.msra.mxu0 %v453
      %467 = vmatprep.subr.bf16.mxu0 0
      %468 = vmatpush1.bf16.msra.mxu0 %v438
      %469 = vmatprep.subr.bf16.mxu0 0
      %470 = vmatpush1.bf16.msra.mxu0 %v437
      %471 = vmatprep.subr.bf16.mxu0 0
      %472 = vmatpush2.bf16.msra.mxu0 0
      %473 = vmatprep.subr.bf16.mxu0 0
      %474 = vmatpush2.bf16.msra.mxu0 0
      %475 = vmatprep.subr.bf16.mxu0 0
      %476 = vmatpush2.bf16.msra.mxu0 0
      %477 = vmatprep.subr.bf16.mxu0 0
      %478 = vmatpush2.bf16.msra.mxu0 0
      %479 = vmatprep.subr.bf16.mxu0 0
      %480 = vmatpush2.bf16.msra.mxu0 0
      %481 = vmatprep.subr.bf16.mxu0 0
      %482 = vmatpush2.bf16.msra.mxu0 0
      %483 = vmatprep.subr.bf16.mxu0 0
      %484 = vmatpush2.bf16.msra.mxu0 0
      %485 = vmatprep.subr.bf16.mxu0 0
      %486 = vmatpush2.bf16.msra.mxu0 0
      %487 = vmatprep.mubr.bf16.mxu0 0
      %488 = vmatmul.mubr.bf16.gmra.mxu0 %v449
      %v489 = vpop.f32.mrf.mxu0
      %v490 = vadd.f32 %v445, %v489
      %v491 = vpop.f32.mrf.mxu0
      %v492 = vpop.f32.mrf.mxu0
      %v493 = vpop.f32.mrf.mxu0
      %494 = vdwg.mxu0
      %vm495 = vcmp.gt.f32.partialorder %v490, 0.0
      %v496 = vmul.f32 %v490, 0.1
      %v497 = vsel %vm495, %v490, %v496
      %499 = vrot.lane.b32.xlu0 %v497, 1
      %v500 = vpop.permute.xlu0 %499
      %v502 = vsel %vm327, 0.0, %v500
      %503 = vrot.lane.b32.xlu0 %v497, 127
      %v504 = vpop.permute.xlu0 %503
      %v506 = vsel %vm337, %v504, 0.0
      %v507 = vpack.c.bf16 %v497, %v502
      %v508 = vpack.c.bf16 %v506, %v506
      %v509 = vld [vmem:[%s6] sm:$0xf]
      %vm510 = vcmask 195584
      %v512 = vsel %vm510, %v509, 0
      %v515 = vsel %vm451, %v508, 0
      %517 = vmatprep.subr.bf16.mxu0 0
      %518 = vmatpush1.bf16.msra.mxu0 0
      %519 = vmatprep.subr.bf16.mxu0 0
      %520 = vmatpush1.bf16.msra.mxu0 0
      %521 = vmatprep.subr.bf16.mxu0 0
      %522 = vmatpush1.bf16.msra.mxu0 0
      %523 = vmatprep.subr.bf16.mxu0 0
      %524 = vmatpush1.bf16.msra.mxu0 0
      %525 = vmatprep.subr.bf16.mxu0 0
      %526 = vmatpush1.bf16.msra.mxu0 0
      %527 = vmatprep.subr.bf16.mxu0 0
      %528 = vmatpush1.bf16.msra.mxu0 0
      %529 = vmatprep.subr.bf16.mxu0 0
      %530 = vmatpush1.bf16.msra.mxu0 %v515
      %531 = vmatprep.subr.bf16.mxu0 0
      %532 = vmatpush1.bf16.msra.mxu0 %v507
      %533 = vmatprep.subr.bf16.mxu0 0
      %534 = vmatpush2.bf16.msra.mxu0 0
      %535 = vmatprep.subr.bf16.mxu0 0
      %536 = vmatpush2.bf16.msra.mxu0 0
      %537 = vmatprep.subr.bf16.mxu0 0
      %538 = vmatpush2.bf16.msra.mxu0 0
      %539 = vmatprep.subr.bf16.mxu0 0
      %540 = vmatpush2.bf16.msra.mxu0 0
      %541 = vmatprep.subr.bf16.mxu0 0
      %542 = vmatpush2.bf16.msra.mxu0 0
      %543 = vmatprep.subr.bf16.mxu0 0
      %544 = vmatpush2.bf16.msra.mxu0 0
      %545 = vmatprep.subr.bf16.mxu0 0
      %546 = vmatpush2.bf16.msra.mxu0 0
      %547 = vmatprep.subr.bf16.mxu0 0
      %548 = vmatpush2.bf16.msra.mxu0 0
      %549 = vmatprep.mubr.bf16.mxu0 0
      %550 = vmatmul.mubr.bf16.gmra.mxu0 %v512
      %v551 = vpop.f32.mrf.mxu0
      %v552 = vadd.f32 0.0, %v551
      %v553 = vpop.f32.mrf.mxu0
      %v554 = vpop.f32.mrf.mxu0
      %v555 = vpop.f32.mrf.mxu0
      %556 = vdwg.mxu0
      %v557 = vld [vmem:[#allocation2] sm:$0x1]
      %559 = vset.pattern.permute.xlu0 0
      %560 = vperm.xlu0 %559, %v557
      %v561 = vpop.permute.xlu0 %560
      %v563 = vlaneseq
      %v564 = vshrl.u32 %v563, 7
      %v565 = vsub.s32 0, %v564
      %v566 = vrot.slane %v561, %v565
      %v567 = vadd.f32 %v552, %v566
      %v568 = vld [vmem:[%s315] sm:$0xff]
      %v570 = vrot.slane %v568, 2
      %571 = vrot.lane.b32.xlu0 %v570, 1
      %v572 = vpop.permute.xlu0 %571
      %v574 = vsel %vm327, 0.0, %v572
      %v575 = vrot.slane %v568, 3
      %576 = vrot.lane.b32.xlu0 %v575, 1
      %v577 = vpop.permute.xlu0 %576
      %v579 = vsel %vm327, 0.0, %v577
      %580 = vrot.lane.b32.xlu0 %v568, 127
      %v581 = vpop.permute.xlu0 %580
      %v583 = vsel %vm337, %v581, 0.0
      %v584 = vlaneseq
      %v585 = vshrl.u32 %v584, 7
      %v586 = vsub.s32 0, %v585
      %v587 = vrot.slane %v574, %v586
      %v588 = vmul.f32 %v343, %v587
      %v589 = vadd.f32 %v588, 0.0
      %v590 = vlaneseq
      %v591 = vshrl.u32 %v590, 7
      %v592 = vsub.s32 0, %v591
      %v593 = vrot.slane %v568, %v592
      %v594 = vmul.f32 %v343, %v593
      %v595 = vadd.f32 %v594, 0.0
      %v596 = vlaneseq
      %v597 = vshrl.u32 %v596, 7
      %v598 = vsub.s32 0, %v597
      %v599 = vrot.slane %v579, %v598
      %v600 = vmul.f32 %v359, %v599
      %v601 = vadd.f32 %v589, %v600
      %v602 = vlaneseq
      %v603 = vshrl.u32 %v602, 7
      %v604 = vsub.s32 1, %v603
      %v605 = vrot.slane %v568, %v604
      %v606 = vmul.f32 %v359, %v605
      %v607 = vadd.f32 %v595, %v606
      %v608 = vmul.f32 %v375, %v593
      %v609 = vadd.f32 %v601, %v608
      %v610 = vlaneseq
      %v611 = vshrl.u32 %v610, 7
      %v612 = vsub.s32 2, %v611
      %v613 = vrot.slane %v568, %v612
      %v614 = vmul.f32 %v375, %v613
      %v615 = vadd.f32 %v607, %v614
      %v616 = vmul.f32 %v387, %v605
      %v617 = vadd.f32 %v609, %v616
      %v618 = vlaneseq
      %v619 = vshrl.u32 %v618, 7
      %v620 = vsub.s32 3, %v619
      %v621 = vrot.slane %v568, %v620
      %v622 = vmul.f32 %v387, %v621
      %v623 = vadd.f32 %v615, %v622
      %v624 = vmul.f32 %v399, %v613
      %v625 = vadd.f32 %v617, %v624
      %v626 = vlaneseq
      %v627 = vshrl.u32 %v626, 7
      %v628 = vsub.s32 0, %v627
      %v629 = vrot.slane %v583, %v628
      %v630 = vmul.f32 %v399, %v629
      %v631 = vadd.f32 %v623, %v630
      %v632 = vadd.f32 %v625, %v413
      %vm633 = vcmp.gt.f32.partialorder %v632, 0.0
      %v634 = vmul.f32 %v632, 0.1
      %v635 = vsel %vm633, %v632, %v634
      %v636 = vadd.f32 %v631, %v413
      %vm637 = vcmp.gt.f32.partialorder %v636, 0.0
      %v638 = vmul.f32 %v636, 0.1
      %v639 = vsel %vm637, %v636, %v638
      %642 = vrot.lane.b32.xlu0 %v635, 1
      %v643 = vpop.permute.xlu0 %642
      %644 = vrot.lane.b32.xlu0 %v639, 1
      %v645 = vpop.permute.xlu0 %644
      %v648 = vsel %vm327, 0.0, %v643
      %v649 = vsel %vm327, 0.0, %v645
      %650 = vrot.lane.b32.xlu0 %v635, 127
      %v651 = vpop.permute.xlu0 %650
      %v653 = vsel %vm337, %v651, 0.0
      %v654 = vpack.c.bf16 %v649, %v648
      %v655 = vpack.c.bf16 %v639, %v635
      %v656 = vpack.c.bf16 %v653, %v653
      %v658 = vsel %vm451, %v656, 0
      %660 = vmatprep.subr.bf16.mxu0 0
      %661 = vmatpush1.bf16.msra.mxu0 0
      %662 = vmatprep.subr.bf16.mxu0 0
      %663 = vmatpush1.bf16.msra.mxu0 0
      %664 = vmatprep.subr.bf16.mxu0 0
      %665 = vmatpush1.bf16.msra.mxu0 0
      %666 = vmatprep.subr.bf16.mxu0 0
      %667 = vmatpush1.bf16.msra.mxu0 0
      %668 = vmatprep.subr.bf16.mxu0 0
      %669 = vmatpush1.bf16.msra.mxu0 0
      %670 = vmatprep.subr.bf16.mxu0 0
      %671 = vmatpush1.bf16.msra.mxu0 %v658
      %672 = vmatprep.subr.bf16.mxu0 0
      %673 = vmatpush1.bf16.msra.mxu0 %v655
      %674 = vmatprep.subr.bf16.mxu0 0
      %675 = vmatpush1.bf16.msra.mxu0 %v654
      %676 = vmatprep.subr.bf16.mxu0 0
      %677 = vmatpush2.bf16.msra.mxu0 0
      %678 = vmatprep.subr.bf16.mxu0 0
      %679 = vmatpush2.bf16.msra.mxu0 0
      %680 = vmatprep.subr.bf16.mxu0 0
      %681 = vmatpush2.bf16.msra.mxu0 0
      %682 = vmatprep.subr.bf16.mxu0 0
      %683 = vmatpush2.bf16.msra.mxu0 0
      %684 = vmatprep.subr.bf16.mxu0 0
      %685 = vmatpush2.bf16.msra.mxu0 0
      %686 = vmatprep.subr.bf16.mxu0 0
      %687 = vmatpush2.bf16.msra.mxu0 0
      %688 = vmatprep.subr.bf16.mxu0 0
      %689 = vmatpush2.bf16.msra.mxu0 0
      %690 = vmatprep.subr.bf16.mxu0 0
      %691 = vmatpush2.bf16.msra.mxu0 0
      %692 = vmatprep.mubr.bf16.mxu0 0
      %693 = vmatmul.mubr.bf16.gmra.mxu0 %v449
      %v694 = vpop.f32.mrf.mxu0
      %v695 = vadd.f32 %v445, %v694
      %v696 = vpop.f32.mrf.mxu0
      %v697 = vpop.f32.mrf.mxu0
      %v698 = vpop.f32.mrf.mxu0
      %699 = vdwg.mxu0
      %vm700 = vcmp.gt.f32.partialorder %v695, 0.0
      %v701 = vmul.f32 %v695, 0.1
      %v702 = vsel %vm700, %v695, %v701
      %704 = vrot.lane.b32.xlu0 %v702, 1
      %v705 = vpop.permute.xlu0 %704
      %v707 = vsel %vm327, 0.0, %v705
      %708 = vrot.lane.b32.xlu0 %v702, 127
      %v709 = vpop.permute.xlu0 %708
      %v711 = vsel %vm337, %v709, 0.0
      %v712 = vpack.c.bf16 %v702, %v707
      %v713 = vpack.c.bf16 %v711, %v711
      %v715 = vsel %vm451, %v713, 0
      %717 = vmatprep.subr.bf16.mxu0 0
      %718 = vmatpush1.bf16.msra.mxu0 0
      %719 = vmatprep.subr.bf16.mxu0 0
      %720 = vmatpush1.bf16.msra.mxu0 0
      %721 = vmatprep.subr.bf16.mxu0 0
      %722 = vmatpush1.bf16.msra.mxu0 0
      %723 = vmatprep.subr.bf16.mxu0 0
      %724 = vmatpush1.bf16.msra.mxu0 0
      %725 = vmatprep.subr.bf16.mxu0 0
      %726 = vmatpush1.bf16.msra.mxu0 0
      %727 = vmatprep.subr.bf16.mxu0 0
      %728 = vmatpush1.bf16.msra.mxu0 0
      %729 = vmatprep.subr.bf16.mxu0 0
      %730 = vmatpush1.bf16.msra.mxu0 %v715
      %731 = vmatprep.subr.bf16.mxu0 0
      %732 = vmatpush1.bf16.msra.mxu0 %v712
      %733 = vmatprep.subr.bf16.mxu0 0
      %734 = vmatpush2.bf16.msra.mxu0 0
      %735 = vmatprep.subr.bf16.mxu0 0
      %736 = vmatpush2.bf16.msra.mxu0 0
      %737 = vmatprep.subr.bf16.mxu0 0
      %738 = vmatpush2.bf16.msra.mxu0 0
      %739 = vmatprep.subr.bf16.mxu0 0
      %740 = vmatpush2.bf16.msra.mxu0 0
      %741 = vmatprep.subr.bf16.mxu0 0
      %742 = vmatpush2.bf16.msra.mxu0 0
      %743 = vmatprep.subr.bf16.mxu0 0
      %744 = vmatpush2.bf16.msra.mxu0 0
      %745 = vmatprep.subr.bf16.mxu0 0
      %746 = vmatpush2.bf16.msra.mxu0 0
      %747 = vmatprep.subr.bf16.mxu0 0
      %748 = vmatpush2.bf16.msra.mxu0 0
      %749 = vmatprep.mubr.bf16.mxu0 0
      %750 = vmatmul.mubr.bf16.gmra.mxu0 %v512
      %v751 = vpop.f32.mrf.mxu0
      %v752 = vadd.f32 0.0, %v751
      %v753 = vpop.f32.mrf.mxu0
      %v754 = vpop.f32.mrf.mxu0
      %v755 = vpop.f32.mrf.mxu0
      %756 = vdwg.mxu0
      %v757 = vadd.f32 %v752, %v566
      %v758 = vsub.f32 %v418, %v635
      %v759 = vsub.f32 %v422, %v639
      %v760 = vand.u32 2147483647, %v758
      %v761 = vand.u32 2147483647, %v759
      %vm762 = vcmask 130048
      %v763 = vsel %vm762, %v760, 0.0
      %v764 = vsel %vm762, %v761, 0.0
      %v765 = vadd.f32 %v763, %v764
      %v766 = vrot.slane %v765, 4
      %v767 = vadd.f32 %v765, %v766
      %v768 = vrot.slane %v767, 2
      %v769 = vadd.f32 %v767, %v768
      %v770 = vrot.slane %v769, 1
      %v771 = vadd.f32 %v769, %v770
      %v772 = vsub.f32 %v497, %v702
      %v773 = vand.u32 2147483647, %v772
      %v774 = vsel %vm762, %v773, 0.0
      %v775 = vrot.slane %v774, 4
      %v776 = vadd.f32 %v774, %v775
      %v777 = vrot.slane %v776, 2
      %v778 = vadd.f32 %v776, %v777
      %v779 = vrot.slane %v778, 1
      %v780 = vadd.f32 %v778, %v779
      %v782 = vrot.slane %v757, 7
      %vm784 = vcmask 1040384
      %v785 = vsel %vm784, %v567, %v782
      %vm786 = vcmask 1041408
      %v787 = vsel %vm786, %v785, %v771
      %vm788 = vcmask 1042432
      %v789 = vsel %vm788, %v787, %v780
      %v790 = vsel %vm451, %v789, 0.0
      %791 = vst.msk [vmem:[%s319] sm:$0xff] %vm762, %v790
      %p792 = scmp.lt.s32.totalorder %s21, 1
      %s793 = scalar_select %p792, %s21, 1
      %s794 = smul.addr %s793, 8
      %s795 = scalar_lea.vmem %s8, %s794
      // Predicated region
      $region53: #{_forward_generator.4} parent=51 // pred_check
        %p796 = pneg %p217
      $region54: #{_forward_generator.4} parent=51 // pred_check_branch
        %798 = sbr.rel (%p796) target = $region56
      $region55: #{_forward_generator.4} parent=51 // pred_region
        _
      $region56: #{_forward_generator.4} parent=51 // pred_fallthru
        _
    $region52: #{_forward_generator.4} parent=5 // pred_fallthru
      _
    %p799 = scmp.le.s32.totalorder 2, %s16
    // Predicated region
    $region57: #{_forward_generator.4} parent=5 // pred_check
      %p800 = pneg %p799
    $region58: #{_forward_generator.4} parent=5 // pred_check_branch
      %802 = sbr.rel (%p800) target = $region60
    $region59: #{_forward_generator.4} parent=5 // pred_region
      %s803 = ssub.s32 %s16, 2
      // Predicated region
      $region61: #{_forward_generator.4} parent=59 // pred_check
        %p804 = pneg %p223
      $region62: #{_forward_generator.4} parent=59 // pred_check_branch
        %806 = sbr.rel (%p804) target = $region64
      $region63: #{_forward_generator.4} parent=59 // pred_region
        %p807 = scmp.lt.s32.totalorder %s22, 1
        %s808 = scalar_select %p807, %s22, 1
        %s809 = smul.addr %s808, 8
        %s810 = scalar_lea.vmem %s8, %s809
      $region64: #{_forward_generator.4} parent=59 // pred_fallthru
        _
    $region60: #{_forward_generator.4} parent=5 // pred_fallthru
      _
  $region6: #{_forward_generator.4} parent=0 // loop_footer
    %s20 = sadd.s32 1, %s16
  $region7: #{_forward_generator.4} parent=0 // loop_footer_branch
    %15 = sbr.rel target = $region3
  $region8: #{_forward_generator.4} parent=0 // loop_exit
    _

// kernel: _forward_generator.5
$region0: #{_forward_generator.5}
  #allocation0 [shape = 'u32[]', space=smem, size = 0x4, offset = 0x4, fixed_abs, tag = 'smem constant byte address 0x4 - core index']
  #allocation1 [shape = 'u32[144,128]{1,0:T(1,128)}', space=vmem, size = 0x12000, scoped, tag = 'internal scratch']
  #allocation2 [shape = 'f32[1]{0:T(128)S(6)}', space=smem, size = 0x200, scoped, tag = 'scoped memory for _forward_generator.5']
  %s0 = inlined_call_operand.vmem [shape: f32[2,8,16], index: 0, kind: input, shape index: {}]
  %s1 = inlined_call_operand.vmem [shape: f32[2,4,16], index: 1, kind: input, shape index: {}]
  %s2 = inlined_call_operand.vmem [shape: f32[2,8,16], index: 2, kind: input, shape index: {}]
  %s3 = inlined_call_operand.vmem [shape: f32[2,1,16], index: 3, kind: input, shape index: {}]
  %s4 = inlined_call_operand.vmem [shape: f32[8,8], index: 4, kind: input, shape index: {}]
  %s5 = inlined_call_operand.<no memory space> [shape: f32[1], index: 5, kind: input, shape index: {}]
  %s6 = inlined_call_operand.vmem [shape: f32[1,8], index: 6, kind: output, shape index: {}]
  %s7 = sld [smem:[#allocation0]]
  $region34: #{_forward_generator.5} parent=0
    _
  %s9 = ssub.s32 1, %s7
  %s10 = scalar_select 0, %s9, %s7
  %11 = sst [smem:[#allocation2]] %s5
  $region1: #{_forward_generator.5} parent=0
    #allocation3 [shape = 'u8[512]{0}', space=smem, size = 0x200, scoped, tag = 'output window, operand 0, single buffered']
    #allocation4 [shape = 's32[1]{0}', space=sflag, size = 0x4, scoped, tag = 'scoped memory for _forward_generator.5']
    %12 = vsyncpa [#allocation4], 0
    // Predicated region
    $region2: #{_forward_generator.5} parent=1 // pred_check
      _
    $region3: #{_forward_generator.5} parent=1 // pred_check_branch
      %14 = sbr.rel (0) target = $region5
    $region4: #{_forward_generator.5} parent=1 // pred_region
      _
    $region5: #{_forward_generator.5} parent=1 // pred_fallthru
      _
    // Predicated region
    $region6: #{_forward_generator.5} parent=1 // pred_check
      _
    $region7: #{_forward_generator.5} parent=1 // pred_check_branch
      %16 = sbr.rel (0) target = $region9
    $region8: #{_forward_generator.5} parent=1 // pred_region
      _
    $region9: #{_forward_generator.5} parent=1 // pred_fallthru
      _
    // Predicated region
    $region10: #{_forward_generator.5} parent=1 // pred_check
      _
    $region11: #{_forward_generator.5} parent=1 // pred_check_branch
      %18 = sbr.rel (0) target = $region13
    $region12: #{_forward_generator.5} parent=1 // pred_region
      _
    $region13: #{_forward_generator.5} parent=1 // pred_fallthru
      _
    // Predicated region
    $region14: #{_forward_generator.5} parent=1 // pred_check
      _
    $region15: #{_forward_generator.5} parent=1 // pred_check_branch
      %20 = sbr.rel (0) target = $region17
    $region16: #{_forward_generator.5} parent=1 // pred_region
      _
    $region17: #{_forward_generator.5} parent=1 // pred_fallthru
      _
    // Predicated region
    $region18: #{_forward_generator.5} parent=1 // pred_check
      _
    $region19: #{_forward_generator.5} parent=1 // pred_check_branch
      %22 = sbr.rel (0) target = $region21
    $region20: #{_forward_generator.5} parent=1 // pred_region
      _
    $region21: #{_forward_generator.5} parent=1 // pred_fallthru
      _
    // Predicated region
    $region22: #{_forward_generator.5} parent=1 // pred_check
      _
    $region23: #{_forward_generator.5} parent=1 // pred_check_branch
      %24 = sbr.rel (0) target = $region25
    $region24: #{_forward_generator.5} parent=1 // pred_region
      _
    $region25: #{_forward_generator.5} parent=1 // pred_fallthru
      _
    %v25 = vld [vmem:[%s0] sm:$0xff]
    %v26 = vld [vmem:[%s0 + $0x8] sm:$0xff]
    %v27 = vsub.f32 1.0, %v25
    %v28 = vsub.f32 1.0, %v26
    %v29 = vmul.f32 %v27, %v27
    %v30 = vmul.f32 %v28, %v28
    %v33 = vrot.slane %v29, 1
    %v34 = vrot.slane %v30, 1
    %vm37 = vcmask 122880
    %v38 = vsel %vm37, %v33, 0.0
    %v39 = vsel %vm37, %v34, 0.0
    %v40 = vadd.f32 %v38, %v39
    %41 = vadd.xlane.f32.xlu0 %v40
    %v42 = vpop.xlane.xlu0 %41
    %v43 = vrot.slane %v42, 4
    %v44 = vadd.f32 %v42, %v43
    %v45 = vrot.slane %v44, 2
    %v46 = vadd.f32 %v44, %v45
    %v47 = vrot.slane %v46, 1
    %v48 = vadd.f32 %v46, %v47
    %s49 = vtos %v48
    %v50 = vrcp.pop 32.0
    %s51 = vtos %v50
    %s52 = smul.f32 %s49, %s51
    %v55 = vrot.slane %v25, 2
    %v56 = vrot.slane %v26, 2
    %v59 = vsel %vm37, %v55, 0.0
    %v60 = vsel %vm37, %v56, 0.0
    %v61 = vadd.f32 %v59, %v60
    %62 = vadd.xlane.f32.xlu0 %v61
    %v63 = vpop.xlane.xlu0 %62
    %v64 = vrot.slane %v63, 4
    %v65 = vadd.f32 %v63, %v64
    %v66 = vrot.slane %v65, 2
    %v67 = vadd.f32 %v65, %v66
    %v68 = vrot.slane %v67, 1
    %v69 = vadd.f32 %v67, %v68
    %s70 = vtos %v69
    %v71 = vrcp.pop 512.0
    %s72 = vtos %v71
    %s73 = smul.f32 %s70, %s72
    %v74 = vrot.slane %v25, 3
    %v75 = vrot.slane %v26, 3
    %v78 = vsel %vm37, %v74, 0.0
    %v79 = vsel %vm37, %v75, 0.0
    %v80 = vadd.f32 %v78, %v79
    %81 = vadd.xlane.f32.xlu0 %v80
    %v82 = vpop.xlane.xlu0 %81
    %v83 = vrot.slane %v82, 4
    %v84 = vadd.f32 %v82, %v83
    %v85 = vrot.slane %v84, 2
    %v86 = vadd.f32 %v84, %v85
    %v87 = vrot.slane %v86, 1
    %v88 = vadd.f32 %v86, %v87
    %s89 = vtos %v88
    %v90 = vrcp.pop 256.0
    %s91 = vtos %v90
    %s92 = smul.f32 %s89, %s91
    %s93 = sadd.f32 %s73, %s92
    %s94 = smul.f32 %s93, 2.0
    %v95 = vld [vmem:[%s1] sm:$0xf]
    %v96 = vld [vmem:[%s1 + $0x4] sm:$0xf]
    %v97 = vld [vmem:[%s2] sm:$0xff]
    %v98 = vld [vmem:[%s2 + $0x8] sm:$0xff]
    %v100 = vrot.slane %v95, 4
    %101 = vrot.lane.b32.xlu0 %v100, 127
    %v102 = vpop.permute.xlu0 %101
    %vm104 = vcmask 1043456
    %v105 = vsel %vm104, %v95, %v102
    %v107 = vrot.slane %v96, 4
    %108 = vrot.lane.b32.xlu0 %v107, 127
    %v109 = vpop.permute.xlu0 %108
    %v111 = vsel %vm104, %v96, %v109
    %113 = vrot.lane.b32.xlu0 %v111, 15
    %v114 = vpop.permute.xlu0 %113
    %vm116 = vcmask 121856
    %v117 = vsel %vm116, %v105, %v114
    %v119 = vrot.slane %v97, 4
    %120 = vrot.lane.b32.xlu0 %v119, 127
    %v121 = vpop.permute.xlu0 %120
    %v123 = vsel %vm104, %v97, %v121
    %v125 = vrot.slane %v98, 4
    %126 = vrot.lane.b32.xlu0 %v125, 127
    %v127 = vpop.permute.xlu0 %126
    %v129 = vsel %vm104, %v98, %v127
    %131 = vrot.lane.b32.xlu0 %v129, 15
    %v132 = vpop.permute.xlu0 %131
    %v134 = vsel %vm116, %v123, %v132
    %v135 = vld [vmem:[%s4] sm:$0xff]
    %vm136 = vcmask 64512
    %v138 = vsel %vm136, %v135, 0
    %140 = vmatprep.subr.mxu0 0.0
    %141 = vmatpush1.msra.mxu0 0.0
    %142 = vmatprep.subr.mxu0 0.0
    %143 = vmatpush1.msra.mxu0 0.0
    %144 = vmatprep.subr.mxu0 0.0
    %145 = vmatpush1.msra.mxu0 0.0
    %146 = vmatprep.subr.mxu0 0.0
    %147 = vmatpush1.msra.mxu0 0.0
    %148 = vmatprep.subr.mxu0 0.0
    %149 = vmatpush1.msra.mxu0 0.0
    %150 = vmatprep.subr.mxu0 0.0
    %151 = vmatpush1.msra.mxu0 0.0
    %152 = vmatprep.subr.mxu0 0.0
    %153 = vmatpush1.msra.mxu0 0.0
    %154 = vmatprep.subr.mxu0 0.0
    %155 = vmatpush1.msra.mxu0 0.0
    %156 = vmatprep.subr.mxu0 0.0
    %157 = vmatpush1.msra.mxu0 0.0
    %158 = vmatprep.subr.mxu0 0.0
    %159 = vmatpush1.msra.mxu0 0.0
    %160 = vmatprep.subr.mxu0 0.0
    %161 = vmatpush1.msra.mxu0 0.0
    %162 = vmatprep.subr.mxu0 0.0
    %163 = vmatpush1.msra.mxu0 0.0
    %164 = vmatprep.subr.mxu0 0.0
    %165 = vmatpush1.msra.mxu0 0.0
    %166 = vmatprep.subr.mxu0 0.0
    %167 = vmatpush1.msra.mxu0 0.0
    %168 = vmatprep.subr.mxu0 0.0
    %169 = vmatpush1.msra.mxu0 0.0
    %170 = vmatprep.subr.mxu0 0.0
    %171 = vmatpush1.msra.mxu0 %v117
    %172 = vmatprep.subr.mxu0 0.0
    %173 = vmatpush2.msra.mxu0 0.0
    %174 = vmatprep.subr.mxu0 0.0
    %175 = vmatpush2.msra.mxu0 0.0
    %176 = vmatprep.subr.mxu0 0.0
    %177 = vmatpush2.msra.mxu0 0.0
    %178 = vmatprep.subr.mxu0 0.0
    %179 = vmatpush2.msra.mxu0 0.0
    %180 = vmatprep.subr.mxu0 0.0
    %181 = vmatpush2.msra.mxu0 0.0
    %182 = vmatprep.subr.mxu0 0.0
    %183 = vmatpush2.msra.mxu0 0.0
    %184 = vmatprep.subr.mxu0 0.0
    %185 = vmatpush2.msra.mxu0 0.0
    %186 = vmatprep.subr.mxu0 0.0
    %187 = vmatpush2.msra.mxu0 0.0
    %188 = vmatprep.subr.mxu0 0.0
    %189 = vmatpush2.msra.mxu0 0.0
    %190 = vmatprep.subr.mxu0 0.0
    %191 = vmatpush2.msra.mxu0 0.0
    %192 = vmatprep.subr.mxu0 0.0
    %193 = vmatpush2.msra.mxu0 0.0
    %194 = vmatprep.subr.mxu0 0.0
    %195 = vmatpush2.msra.mxu0 0.0
    %196 = vmatprep.subr.mxu0 0.0
    %197 = vmatpush2.msra.mxu0 0.0
    %198 = vmatprep.subr.mxu0 0.0
    %199 = vmatpush2.msra.mxu0 0.0
    %200 = vmatprep.subr.mxu0 0.0
    %201 = vmatpush2.msra.mxu0 0.0
    %202 = vmatprep.subr.mxu0 0.0
    %203 = vmatpush2.msra.mxu0 0.0
    %204 = vmatprep.mubr.f32.mxu0 0.0
    %205 = vmatmul.mubr.f32.gmra.mxu0 %v138
    %v206 = vpop.f32.mrf.mxu0
    %v207 = vadd.f32 0.0, %v206
    %v208 = vpop.f32.mrf.mxu0
    %209 = vdwg.mxu0
    %210 = vmatprep.subr.mxu0 0.0
    %211 = vmatpush1.msra.mxu0 0.0
    %212 = vmatprep.subr.mxu0 0.0
    %213 = vmatpush1.msra.mxu0 0.0
    %214 = vmatprep.subr.mxu0 0.0
    %215 = vmatpush1.msra.mxu0 0.0
    %216 = vmatprep.subr.mxu0 0.0
    %217 = vmatpush1.msra.mxu0 0.0
    %218 = vmatprep.subr.mxu0 0.0
    %219 = vmatpush1.msra.mxu0 0.0
    %220 = vmatprep.subr.mxu0 0.0
    %221 = vmatpush1.msra.mxu0 0.0
    %222 = vmatprep.subr.mxu0 0.0
    %223 = vmatpush1.msra.mxu0 0.0
    %224 = vmatprep.subr.mxu0 0.0
    %225 = vmatpush1.msra.mxu0 0.0
    %226 = vmatprep.subr.mxu0 0.0
    %227 = vmatpush1.msra.mxu0 0.0
    %228 = vmatprep.subr.mxu0 0.0
    %229 = vmatpush1.msra.mxu0 0.0
    %230 = vmatprep.subr.mxu0 0.0
    %231 = vmatpush1.msra.mxu0 0.0
    %232 = vmatprep.subr.mxu0 0.0
    %233 = vmatpush1.msra.mxu0 0.0
    %234 = vmatprep.subr.mxu0 0.0
    %235 = vmatpush1.msra.mxu0 0.0
    %236 = vmatprep.subr.mxu0 0.0
    %237 = vmatpush1.msra.mxu0 0.0
    %238 = vmatprep.subr.mxu0 0.0
    %239 = vmatpush1.msra.mxu0 0.0
    %240 = vmatprep.subr.mxu0 0.0
    %241 = vmatpush1.msra.mxu0 %v134
    %242 = vmatprep.subr.mxu0 0.0
    %243 = vmatpush2.msra.mxu0 0.0
    %244 = vmatprep.subr.mxu0 0.0
    %245 = vmatpush2.msra.mxu0 0.0
    %246 = vmatprep.subr.mxu0 0.0
    %247 = vmatpush2.msra.mxu0 0.0
    %248 = vmatprep.subr.mxu0 0.0
    %249 = vmatpush2.msra.mxu0 0.0
    %250 = vmatprep.subr.mxu0 0.0
    %251 = vmatpush2.msra.mxu0 0.0
    %252 = vmatprep.subr.mxu0 0.0
    %253 = vmatpush2.msra.mxu0 0.0
    %254 = vmatprep.subr.mxu0 0.0
    %255 = vmatpush2.msra.mxu0 0.0
    %256 = vmatprep.subr.mxu0 0.0
    %257 = vmatpush2.msra.mxu0 0.0
    %258 = vmatprep.subr.mxu0 0.0
    %259 = vmatpush2.msra.mxu0 0.0
    %260 = vmatprep.subr.mxu0 0.0
    %261 = vmatpush2.msra.mxu0 0.0
    %262 = vmatprep.subr.mxu0 0.0
    %263 = vmatpush2.msra.mxu0 0.0
    %264 = vmatprep.subr.mxu0 0.0
    %265 = vmatpush2.msra.mxu0 0.0
    %266 = vmatprep.subr.mxu0 0.0
    %267 = vmatpush2.msra.mxu0 0.0
    %268 = vmatprep.subr.mxu0 0.0
    %269 = vmatpush2.msra.mxu0 0.0
    %270 = vmatprep.subr.mxu0 0.0
    %271 = vmatpush2.msra.mxu0 0.0
    %272 = vmatprep.subr.mxu0 0.0
    %273 = vmatpush2.msra.mxu0 0.0
    %274 = vmatprep.mubr.f32.mxu0 0.0
    %275 = vmatmul.mubr.f32.gmra.mxu0 %v138
    %v276 = vpop.f32.mrf.mxu0
    %v277 = vadd.f32 0.0, %v276
    %v278 = vpop.f32.mrf.mxu0
    %279 = vdwg.mxu0
    %v280 = vand.u32 2147483647, %v277
    %v281 = vadd.f32 %v280, 1e-05
    %v282 = vlog2.pop %v281
    %v283 = vmul.f32 %v282, 0.6931472
    %v284 = vand.u32 2147483647, %v207
    %v285 = vadd.f32 %v284, 1e-05
    %v286 = vlog2.pop %v285
    %v287 = vmul.f32 %v286, 0.6931472
    %v288 = vsub.f32 %v283, %v287
    %v289 = vand.u32 2147483647, %v288
    %vm290 = vcmask 244736
    %v291 = vsel %vm290, %v289, 0.0
    %292 = vadd.xlane.f32.xlu0 %v291
    %v293 = vpop.xlane.xlu0 %292
    %v294 = vrot.slane %v293, 4
    %v295 = vadd.f32 %v293, %v294
    %v296 = vrot.slane %v295, 2
    %v297 = vadd.f32 %v295, %v296
    %v298 = vrot.slane %v297, 1
    %v299 = vadd.f32 %v297, %v298
    %s300 = vtos %v299
    %v301 = vrcp.pop 240.0
    %s302 = vtos %v301
    %s303 = smul.f32 %s300, %s302
    %s304 = sld [smem:[#allocation2]]
    %v305 = vrot.slane %v25, 1
    %v306 = vrot.slane %v26, 1
    %v309 = vsub.f32 %v25, %v305
    %v310 = vsub.f32 %v26, %v306
    %v311 = vstv %s304
    %vm312 = vcmp.lt.f32.partialorder %v309, %v311
    %vm313 = vcmp.lt.f32.partialorder %v310, %v311
    %v314 = vsel %vm312, 1, 0
    %v315 = vsel %vm313, 1, 0
    %v316 = vcvt.s32.f32 %v314
    %v317 = vcvt.s32.f32 %v315
    %v318 = vsel %vm37, %v316, 0.0
    %v319 = vsel %vm37, %v317, 0.0
    %v320 = vadd.f32 %v318, %v319
    %321 = vadd.xlane.f32.xlu0 %v320
    %v322 = vpop.xlane.xlu0 %321
    %v323 = vrot.slane %v322, 4
    %v324 = vadd.f32 %v322, %v323
    %v325 = vrot.slane %v324, 2
    %v326 = vadd.f32 %v324, %v325
    %v327 = vrot.slane %v326, 1
    %v328 = vadd.f32 %v326, %v327
    %s329 = vtos %v328
    %v330 = vsub.f32 %v309, %v311
    %v331 = vsub.f32 %v310, %v311
    %v332 = vmul.f32 %v330, %v330
    %v333 = vmul.f32 %v331, %v331
    %v334 = vsel %vm312, %v332, 0.0
    %v335 = vsel %vm313, %v333, 0.0
    %p336 = scmp.gt.f32.partialorder %s329, 0.0
    %v337 = vsel %vm37, %v334, 0.0
    %v338 = vsel %vm37, %v335, 0.0
    %v339 = vadd.f32 %v337, %v338
    %340 = vadd.xlane.f32.xlu0 %v339
    %v341 = vpop.xlane.xlu0 %340
    %v342 = vrot.slane %v341, 4
    %v343 = vadd.f32 %v341, %v342
    %v344 = vrot.slane %v343, 2
    %v345 = vadd.f32 %v343, %v344
    %v346 = vrot.slane %v345, 1
    %v347 = vadd.f32 %v345, %v346
    %s348 = vtos %v347
    %s349 = smax.f32 %s329, 1.0
    %v350 = vstv %s349
    %v351 = vrcp.pop %v350
    %s352 = vtos %v351
    %s353 = smul.f32 %s348, %s352
    %s354 = scalar_select %p336, %s353, 0.0
    %s355 = ssub.f32 0.04, %s354
    %s356 = smax.f32 %s355, 0.0
    %s357 = ssub.f32 0.04, %s356
    %v358 = vld [vmem:[%s3] sm:$0x1]
    %v359 = vld [vmem:[%s3 + $0x1] sm:$0x1]
    %v362 = vlaneseq
    %v363 = vshrl.u32 %v362, 7
    %v364 = vsub.s32 0, %v363
    %v365 = vrot.slane %v358, %v364
    %v366 = vlaneseq
    %v367 = vshrl.u32 %v366, 7
    %v368 = vsub.s32 0, %v367
    %v369 = vrot.slane %v359, %v368
    %v372 = vsub.f32 %v97, %v365
    %v373 = vsub.f32 %v98, %v369
    %v374 = vand.u32 2147483647, %v372
    %v375 = vand.u32 2147483647, %v373
    %v378 = vrot.slane %v374, 4
    %v379 = vrot.slane %v375, 4
    %v382 = vsel %vm37, %v378, 0.0
    %v383 = vsel %vm37, %v379, 0.0
    %v384 = vadd.f32 %v382, %v383
    %385 = vadd.xlane.f32.xlu0 %v384
    %v386 = vpop.xlane.xlu0 %385
    %v387 = vrot.slane %v386, 4
    %v388 = vadd.f32 %v386, %v387
    %v389 = vrot.slane %v388, 2
    %v390 = vadd.f32 %v388, %v389
    %v391 = vrot.slane %v390, 1
    %v392 = vadd.f32 %v390, %v391
    %s393 = vtos %v392
    %v394 = vrcp.pop 32.0
    %s395 = vtos %v394
    %s396 = smul.f32 %s393, %s395
    %s397 = smul.f32 %s94, 2.0
    %s398 = sadd.f32 %s52, %s397
    %s399 = smul.f32 %s303, 45.0
    %s400 = sadd.f32 %s398, %s399
    %s401 = sadd.f32 %s400, %s357
    %s402 = sadd.f32 %s401, %s396
    %s403 = scalar_lea.smem [#allocation3], 0
    %404 = sst [smem:[%s403]] %s402
    %s405 = scalar_lea.smem [#allocation3], 1
    %406 = sst [smem:[%s405]] %s52
    %s407 = scalar_lea.smem [#allocation3], 2
    %408 = sst [smem:[%s407]] %s94
    %s409 = scalar_lea.smem [#allocation3], 3
    %410 = sst [smem:[%s409]] %s303
    %s411 = scalar_lea.smem [#allocation3], 4
    %412 = sst [smem:[%s411]] %s357
    %s413 = scalar_lea.smem [#allocation3], 5
    %414 = sst [smem:[%s413]] %s396
    %s415 = scalar_lea.smem [#allocation3], 6
    %416 = sst [smem:[%s415]] 0.0
    %s417 = scalar_lea.smem [#allocation3], 7
    %418 = sst [smem:[%s417]] 0.0
    // Predicated region
    $region26: #{_forward_generator.5} parent=1 // pred_check
      _
    $region27: #{_forward_generator.5} parent=1 // pred_check_branch
      %420 = sbr.rel (0) target = $region29
    $region28: #{_forward_generator.5} parent=1 // pred_region
      %s422 = ssub.s32 16, 16
      %423 = vsyncadd [#allocation4], %s422
      %s425 = sshll.u32 %s6, 4
      %s426 = int_to_ptr.vmem [resolvable:$true] %s425
      %428 = dma.smem_to_vmem [#allocation3], 16, %s426, [#allocation4]
    $region29: #{_forward_generator.5} parent=1 // pred_fallthru
      _
    // Predicated region
    $region30: #{_forward_generator.5} parent=1 // pred_check
      _
    $region31: #{_forward_generator.5} parent=1 // pred_check_branch
      %430 = sbr.rel (0) target = $region33
    $region32: #{_forward_generator.5} parent=1 // pred_region
      %431 = dma.done [#allocation4], 16
    $region33: #{_forward_generator.5} parent=1 // pred_fallthru
      _
    %432 = sfence
    %433 = vsyncpa [#allocation4], 1

</llo_original>
